<compile_context>
chip_gen: v7x
topology: tpu7x:2x2x1
jax: 0.10.0
libtpu: 0.0.40
codegen_flags: <defaults>
</compile_context>

<pallas_src>
import functools

import jax
import jax.numpy as jnp
from jax.experimental import pallas as pl
from jax.experimental.pallas import tpu as pltpu


# ------------------------- PDiff.config (synthetic) -------------------------
CONFIG = {
    "layer_channels": (1, 8, 16, 8, 1),   # OneDimCNN channel schedule
    "model_dim": 32,                      # flattened parameter-vector length
    "kernel_size": 3,                     # odd -> "same" padding
    "beta": (1e-4, 0.02),
    "T": 50,
}


# ------------------------------ fused Pallas kernel ------------------------------
def _pdiff_fused_kernel(*refs, B, L, K, n_layers):
    """Fused q-sample -> OneDimCNN -> MSE.

    refs layout:
      [0:5]             x0, noise, temb, sa, sb          each (1, B*L) f32 VMEM
      [5:5+2*n_layers]  (w_l, b_l) per conv layer: (K, Cout, Cin), (Cout, 1)
      [-1]              loss output, (1, 1) f32 SMEM
    """
    x0_ref, noise_ref, temb_ref, sa_ref, sb_ref = refs[:5]
    wb_refs = refs[5:5 + 2 * n_layers]
    loss_ref = refs[5 + 2 * n_layers]

    BL = B * L
    pad = K // 2

    noise = noise_ref[...]
    # q-sample: x_t = sqrt(ab) * x0 + sqrt(1-ab) * eps ; add time/cond embedding.
    x = sa_ref[...] * x0_ref[...] + sb_ref[...] * noise + temb_ref[...]   # (1, BL)

    # position-within-row index, used to zero the "same"-padding halo after the
    # lane rotation (batch rows are packed back-to-back along the lane axis).
    pos = jax.lax.broadcasted_iota(jnp.int32, (1, BL), 1) % L

    for li in range(n_layers):
        w_ref = wb_refs[2 * li]           # (K, Cout, Cin)
        b_ref = wb_refs[2 * li + 1]       # (Cout, 1)
        cout = b_ref.shape[0]
        acc = jnp.zeros((cout, BL), jnp.float32)
        for k in range(K):                # static tap loop
            d = k - pad                   # tap offset in {-pad, ..., +pad}
            if d == 0:
                xs = x
            else:
                # xs[.., p] = x[.., p + d]   (XLU lane rotate, then halo mask)
                xs = pltpu.roll(x, (-d) % BL, 1)
                valid = (pos < L - d) if d > 0 else (pos >= -d)
                xs = jnp.where(valid, xs, 0.0)
            acc = acc + jnp.dot(w_ref[k], xs, preferred_element_type=jnp.float32)
        acc = acc + b_ref[...]
        if li < n_layers - 1:
            acc = acc * jax.nn.sigmoid(acc)   # SiLU (sigmoid on EUP)
        x = acc                               # (Cout, BL)

    # x is the predicted noise, shape (1, BL).  Mean-squared error vs eps.
    diff = x - noise
    loss_ref[0, 0] = jnp.sum(diff * diff) * (1.0 / float(BL))


def _pdiff_fused(x0f, noisef, tembf, saf, sbf, layer_params, *, B, L, K):
    n_layers = len(layer_params)
    flat_wb = []
    for w, b in layer_params:
        flat_wb += [w, b]
    n_in = 5 + 2 * n_layers
    kern = functools.partial(_pdiff_fused_kernel, B=B, L=L, K=K, n_layers=n_layers)
    loss = pl.pallas_call(
        kern,
        out_shape=jax.ShapeDtypeStruct((1, 1), jnp.float32),
        in_specs=[pl.BlockSpec(memory_space=pltpu.MemorySpace.VMEM)] * n_in,
        out_specs=pl.BlockSpec(memory_space=pltpu.MemorySpace.SMEM),
    )(x0f, noisef, tembf, saf, sbf, *flat_wb)
    return loss[0, 0]


# ------------------------------- model pieces -------------------------------
def timestep_embedding(t, dim):
    half = dim // 2
    freqs = jnp.exp(-jnp.log(10000.0) *
                    jnp.arange(half, dtype=jnp.float32) / half)
    args = t.astype(jnp.float32)[:, None] * freqs[None, :]
    return jnp.concatenate([jnp.cos(args), jnp.sin(args)], axis=-1)


def init_onedimcnn_params(key, layer_channels, kernel_size):
    """Weights stored kernel-ready: tap-major (K, Cout, Cin) and (Cout, 1) bias."""
    params = []
    for i in range(len(layer_channels) - 1):
        key, wkey = jax.random.split(key)
        cin, cout = layer_channels[i], layer_channels[i + 1]
        scale = 1.0 / jnp.sqrt(jnp.float32(cin * kernel_size))
        w = jax.random.normal(wkey, (cout, cin, kernel_size), jnp.float32) * scale
        params.append((jnp.transpose(w, (2, 0, 1)),            # (K, Cout, Cin)
                       jnp.zeros((cout, 1), jnp.float32)))      # (Cout, 1)
    return params


@jax.jit
def _pdiff_forward(x, c, key, params, sqrt_ab, sqrt_1mab):
    D = x.shape[-1]
    x0 = x.reshape(-1, D).astype(jnp.float32)        # x.view(-1, x.size(-1))
    B = x0.shape[0]
    BL = B * D
    K = CONFIG["kernel_size"]
    T = CONFIG["T"]

    t_key, n_key = jax.random.split(key)
    t = jax.random.randint(t_key, (B,), 0, T)
    noise = jax.random.normal(n_key, (B, D), jnp.float32)
    temb = timestep_embedding(t, D) + c               # condition added to embedding

    # Lane-dense (1, B*D) slabs: per-row diffusion scales pre-broadcast so the
    # kernel works on full 256-lane vregs (no (B,1) 1-lane inputs).
    sa = jnp.broadcast_to(sqrt_ab[t][:, None], (B, D))
    sb = jnp.broadcast_to(sqrt_1mab[t][:, None], (B, D))
    x0f = x0.reshape(1, BL)
    noisef = noise.reshape(1, BL)
    tembf = temb.reshape(1, BL)
    saf = sa.reshape(1, BL)
    sbf = sb.reshape(1, BL)

    return _pdiff_fused(x0f, noisef, tembf, saf, sbf, params, B=B, L=D, K=K)


class PDiffPallas:
    def __init__(self, sequence_length, key):
        self.sequence_length = sequence_length
        self.cfg = CONFIG
        self.params = tuple(init_onedimcnn_params(
            key, CONFIG["layer_channels"], CONFIG["kernel_size"]))
        betas = jnp.linspace(CONFIG["beta"][0], CONFIG["beta"][1],
                             CONFIG["T"], dtype=jnp.float32)
        alphas_bar = jnp.cumprod(1.0 - betas)
        self.sqrt_ab = jnp.sqrt(alphas_bar)
        self.sqrt_1mab = jnp.sqrt(1.0 - alphas_bar)

    def forward(self, x, c=0.0, *, key):
        return _pdiff_forward(x, jnp.float32(c), key, self.params,
                              self.sqrt_ab, self.sqrt_1mab)

    # TODO(synk): sampling path (diffusion_sampler reverse DDPM loop) not
    # implemented; forward here covers the training-loss path only.


if __name__ == "__main__":
    key = jax.random.PRNGKey(0)
    pkey, xkey, fkey = jax.random.split(key, 3)
    model = PDiffPallas(sequence_length=8, key=pkey)
    x = jax.random.normal(xkey, (2, 4, CONFIG["model_dim"]), jnp.float32)
    loss = model.forward(x, c=0.0, key=fkey)
    jax.block_until_ready(loss)
    assert loss.shape == () and bool(jnp.isfinite(loss))
    print("KERNEL_OK")
</pallas_src>

<mosaic_0001>
module attributes {stable_mosaic.version = 11 : i64} {
  func.func @_pdiff_fused_kernel(%arg0: memref<1x256xf32, #tpu.memory_space<vmem>>, %arg1: memref<1x256xf32, #tpu.memory_space<vmem>>, %arg2: memref<1x256xf32, #tpu.memory_space<vmem>>, %arg3: memref<1x256xf32, #tpu.memory_space<vmem>>, %arg4: memref<1x256xf32, #tpu.memory_space<vmem>>, %arg5: memref<3x8x1xf32, #tpu.memory_space<vmem>>, %arg6: memref<8x1xf32, #tpu.memory_space<vmem>>, %arg7: memref<3x16x8xf32, #tpu.memory_space<vmem>>, %arg8: memref<16x1xf32, #tpu.memory_space<vmem>>, %arg9: memref<3x8x16xf32, #tpu.memory_space<vmem>>, %arg10: memref<8x1xf32, #tpu.memory_space<vmem>>, %arg11: memref<3x1x8xf32, #tpu.memory_space<vmem>>, %arg12: memref<1x1xf32, #tpu.memory_space<vmem>>, %arg13: memref<1x1xf32, #tpu.memory_space<smem>>) attributes {dimension_semantics = [], scalar_prefetch = 0 : i64, scratch_operands = 0 : i64, tpu.core_type = #tpu.core_type<tc>} {
    %c0 = arith.constant 0 : index
    %c0_0 = arith.constant 0 : index
    %0 = vector.load %arg1[%c0, %c0_0] : memref<1x256xf32, #tpu.memory_space<vmem>>, vector<1x256xf32>
    %c0_1 = arith.constant 0 : index
    %c0_2 = arith.constant 0 : index
    %1 = vector.load %arg3[%c0_1, %c0_2] : memref<1x256xf32, #tpu.memory_space<vmem>>, vector<1x256xf32>
    %c0_3 = arith.constant 0 : index
    %c0_4 = arith.constant 0 : index
    %2 = vector.load %arg0[%c0_3, %c0_4] : memref<1x256xf32, #tpu.memory_space<vmem>>, vector<1x256xf32>
    %3 = arith.mulf %1, %2 : vector<1x256xf32>
    %c0_5 = arith.constant 0 : index
    %c0_6 = arith.constant 0 : index
    %4 = vector.load %arg4[%c0_5, %c0_6] : memref<1x256xf32, #tpu.memory_space<vmem>>, vector<1x256xf32>
    %5 = arith.mulf %4, %0 : vector<1x256xf32>
    %6 = arith.addf %3, %5 : vector<1x256xf32>
    %c0_7 = arith.constant 0 : index
    %c0_8 = arith.constant 0 : index
    %7 = vector.load %arg2[%c0_7, %c0_8] : memref<1x256xf32, #tpu.memory_space<vmem>>, vector<1x256xf32>
    %8 = arith.addf %6, %7 : vector<1x256xf32>
    %9 = tpu.iota {dimensions = array<i32: 1>} : vector<1x256xi32>
    %c32_i32 = arith.constant 32 : i32
    %c0_i32 = arith.constant 0 : i32
    %10 = arith.cmpi eq, %c32_i32, %c0_i32 : i32
    %c1_i32 = arith.constant 1 : i32
    %11 = arith.select %10, %c1_i32, %c32_i32 : i32
    %12 = vector.broadcast %11 : i32 to vector<1x256xi32>
    %13 = arith.remsi %9, %12 : vector<1x256xi32>
    %c0_i32_9 = arith.constant 0 : i32
    %14 = vector.broadcast %c0_i32_9 : i32 to vector<1x256xi32>
    %15 = arith.cmpi ne, %13, %14 : vector<1x256xi32>
    %c0_i32_10 = arith.constant 0 : i32
    %16 = vector.broadcast %c0_i32_10 : i32 to vector<1x256xi32>
    %17 = arith.cmpi slt, %13, %16 : vector<1x256xi32>
    %c0_i32_11 = arith.constant 0 : i32
    %18 = arith.cmpi slt, %11, %c0_i32_11 : i32
    %19 = vector.broadcast %18 : i1 to vector<1x256xi1>
    %20 = vector.broadcast %19 : vector<1x256xi1> to vector<1x256xi1>
    %21 = arith.xori %17, %20 : vector<1x256xi1>
    %22 = arith.andi %21, %15 : vector<1x256xi1>
    %23 = vector.broadcast %11 : i32 to vector<1x256xi32>
    %24 = arith.addi %13, %23 : vector<1x256xi32>
    %25 = arith.select %22, %24, %13 : vector<1x256xi1>, vector<1x256xi32>
    %cst = arith.constant 0.000000e+00 : f32
    %26 = vector.broadcast %cst : f32 to vector<8x256xf32>
    %c1_i32_12 = arith.constant 1 : i32
    %27 = tpu.dynamic_rotate %8 by %c1_i32_12 dim 1 : vector<1x256xf32>, i32 -> vector<1x256xf32>
    %c1_i32_13 = arith.constant 1 : i32
    %28 = vector.broadcast %c1_i32_13 : i32 to vector<1x256xi32>
    %29 = arith.cmpi sge, %25, %28 : vector<1x256xi32>
    %cst_14 = arith.constant 0.000000e+00 : f32
    %30 = vector.broadcast %cst_14 : f32 to vector<1x256xf32>
    %31 = arith.select %29, %27, %30 : vector<1x256xi1>, vector<1x256xf32>
    %c0_15 = arith.constant 0 : index
    %c0_16 = arith.constant 0 : index
    %c0_17 = arith.constant 0 : index
    %32 = vector.load %arg5[%c0_15, %c0_16, %c0_17] : memref<3x8x1xf32, #tpu.memory_space<vmem>>, vector<1x8x1xf32>
    %33 = vector.shape_cast %32 : vector<1x8x1xf32> to vector<8x1xf32>
    %cst_18 = arith.constant dense<0.000000e+00> : vector<8x256xf32>
    %34 = tpu.matmul %33, %31, %cst_18 {dimension_numbers = #tpu.dot_dimension_numbers<[1], [0], [0], [1], [0, 0, 1, 1], [], []>} : vector<8x1xf32>, vector<1x256xf32>, vector<8x256xf32> -> vector<8x256xf32>
    %35 = arith.addf %26, %34 : vector<8x256xf32>
    %c1 = arith.constant 1 : index
    %c0_19 = arith.constant 0 : index
    %c0_20 = arith.constant 0 : index
    %36 = vector.load %arg5[%c1, %c0_19, %c0_20] : memref<3x8x1xf32, #tpu.memory_space<vmem>>, vector<1x8x1xf32>
    %37 = vector.shape_cast %36 : vector<1x8x1xf32> to vector<8x1xf32>
    %cst_21 = arith.constant dense<0.000000e+00> : vector<8x256xf32>
    %38 = tpu.matmul %37, %8, %cst_21 {dimension_numbers = #tpu.dot_dimension_numbers<[1], [0], [0], [1], [0, 0, 1, 1], [], []>} : vector<8x1xf32>, vector<1x256xf32>, vector<8x256xf32> -> vector<8x256xf32>
    %39 = arith.addf %35, %38 : vector<8x256xf32>
    %c255_i32 = arith.constant 255 : i32
    %40 = tpu.dynamic_rotate %8 by %c255_i32 dim 1 : vector<1x256xf32>, i32 -> vector<1x256xf32>
    %c31_i32 = arith.constant 31 : i32
    %41 = vector.broadcast %c31_i32 : i32 to vector<1x256xi32>
    %42 = arith.cmpi slt, %25, %41 : vector<1x256xi32>
    %cst_22 = arith.constant 0.000000e+00 : f32
    %43 = vector.broadcast %cst_22 : f32 to vector<1x256xf32>
    %44 = arith.select %42, %40, %43 : vector<1x256xi1>, vector<1x256xf32>
    %c2 = arith.constant 2 : index
    %c0_23 = arith.constant 0 : index
    %c0_24 = arith.constant 0 : index
    %45 = vector.load %arg5[%c2, %c0_23, %c0_24] : memref<3x8x1xf32, #tpu.memory_space<vmem>>, vector<1x8x1xf32>
    %46 = vector.shape_cast %45 : vector<1x8x1xf32> to vector<8x1xf32>
    %cst_25 = arith.constant dense<0.000000e+00> : vector<8x256xf32>
    %47 = tpu.matmul %46, %44, %cst_25 {dimension_numbers = #tpu.dot_dimension_numbers<[1], [0], [0], [1], [0, 0, 1, 1], [], []>} : vector<8x1xf32>, vector<1x256xf32>, vector<8x256xf32> -> vector<8x256xf32>
    %48 = arith.addf %39, %47 : vector<8x256xf32>
    %c0_26 = arith.constant 0 : index
    %c0_27 = arith.constant 0 : index
    %49 = vector.load %arg6[%c0_26, %c0_27] : memref<8x1xf32, #tpu.memory_space<vmem>>, vector<8x1xf32>
    %50 = vector.broadcast %49 : vector<8x1xf32> to vector<8x256xf32>
    %51 = arith.addf %48, %50 : vector<8x256xf32>
    %52 = arith.negf %51 : vector<8x256xf32>
    %53 = math.exp %52 : vector<8x256xf32>
    %cst_28 = arith.constant 1.000000e+00 : f32
    %54 = vector.broadcast %cst_28 : f32 to vector<8x256xf32>
    %55 = arith.addf %54, %53 : vector<8x256xf32>
    %56 = arith.divf %54, %55 : vector<8x256xf32>
    %57 = arith.mulf %51, %56 : vector<8x256xf32>
    %cst_29 = arith.constant 0.000000e+00 : f32
    %58 = vector.broadcast %cst_29 : f32 to vector<16x256xf32>
    %c1_i32_30 = arith.constant 1 : i32
    %59 = tpu.dynamic_rotate %57 by %c1_i32_30 dim 1 : vector<8x256xf32>, i32 -> vector<8x256xf32>
    %c1_i32_31 = arith.constant 1 : i32
    %60 = vector.broadcast %c1_i32_31 : i32 to vector<1x256xi32>
    %61 = arith.cmpi sge, %25, %60 : vector<1x256xi32>
    %cst_32 = arith.constant 0.000000e+00 : f32
    %62 = vector.shape_cast %61 : vector<1x256xi1> to vector<1x256xi1>
    %63 = vector.broadcast %62 : vector<1x256xi1> to vector<8x256xi1>
    %64 = vector.broadcast %cst_32 : f32 to vector<8x256xf32>
    %65 = arith.select %63, %59, %64 : vector<8x256xi1>, vector<8x256xf32>
    %c0_33 = arith.constant 0 : index
    %c0_34 = arith.constant 0 : index
    %c0_35 = arith.constant 0 : index
    %66 = vector.load %arg7[%c0_33, %c0_34, %c0_35] : memref<3x16x8xf32, #tpu.memory_space<vmem>>, vector<1x16x8xf32>
    %67 = vector.shape_cast %66 : vector<1x16x8xf32> to vector<16x8xf32>
    %cst_36 = arith.constant dense<0.000000e+00> : vector<16x256xf32>
    %68 = tpu.matmul %67, %65, %cst_36 {dimension_numbers = #tpu.dot_dimension_numbers<[1], [0], [0], [1], [0, 0, 1, 1], [], []>} : vector<16x8xf32>, vector<8x256xf32>, vector<16x256xf32> -> vector<16x256xf32>
    %69 = arith.addf %58, %68 : vector<16x256xf32>
    %c1_37 = arith.constant 1 : index
    %c0_38 = arith.constant 0 : index
    %c0_39 = arith.constant 0 : index
    %70 = vector.load %arg7[%c1_37, %c0_38, %c0_39] : memref<3x16x8xf32, #tpu.memory_space<vmem>>, vector<1x16x8xf32>
    %71 = vector.shape_cast %70 : vector<1x16x8xf32> to vector<16x8xf32>
    %cst_40 = arith.constant dense<0.000000e+00> : vector<16x256xf32>
    %72 = tpu.matmul %71, %57, %cst_40 {dimension_numbers = #tpu.dot_dimension_numbers<[1], [0], [0], [1], [0, 0, 1, 1], [], []>} : vector<16x8xf32>, vector<8x256xf32>, vector<16x256xf32> -> vector<16x256xf32>
    %73 = arith.addf %69, %72 : vector<16x256xf32>
    %c255_i32_41 = arith.constant 255 : i32
    %74 = tpu.dynamic_rotate %57 by %c255_i32_41 dim 1 : vector<8x256xf32>, i32 -> vector<8x256xf32>
    %c31_i32_42 = arith.constant 31 : i32
    %75 = vector.broadcast %c31_i32_42 : i32 to vector<1x256xi32>
    %76 = arith.cmpi slt, %25, %75 : vector<1x256xi32>
    %cst_43 = arith.constant 0.000000e+00 : f32
    %77 = vector.shape_cast %76 : vector<1x256xi1> to vector<1x256xi1>
    %78 = vector.broadcast %77 : vector<1x256xi1> to vector<8x256xi1>
    %79 = vector.broadcast %cst_43 : f32 to vector<8x256xf32>
    %80 = arith.select %78, %74, %79 : vector<8x256xi1>, vector<8x256xf32>
    %c2_44 = arith.constant 2 : index
    %c0_45 = arith.constant 0 : index
    %c0_46 = arith.constant 0 : index
    %81 = vector.load %arg7[%c2_44, %c0_45, %c0_46] : memref<3x16x8xf32, #tpu.memory_space<vmem>>, vector<1x16x8xf32>
    %82 = vector.shape_cast %81 : vector<1x16x8xf32> to vector<16x8xf32>
    %cst_47 = arith.constant dense<0.000000e+00> : vector<16x256xf32>
    %83 = tpu.matmul %82, %80, %cst_47 {dimension_numbers = #tpu.dot_dimension_numbers<[1], [0], [0], [1], [0, 0, 1, 1], [], []>} : vector<16x8xf32>, vector<8x256xf32>, vector<16x256xf32> -> vector<16x256xf32>
    %84 = arith.addf %73, %83 : vector<16x256xf32>
    %c0_48 = arith.constant 0 : index
    %c0_49 = arith.constant 0 : index
    %85 = vector.load %arg8[%c0_48, %c0_49] : memref<16x1xf32, #tpu.memory_space<vmem>>, vector<16x1xf32>
    %86 = vector.broadcast %85 : vector<16x1xf32> to vector<16x256xf32>
    %87 = arith.addf %84, %86 : vector<16x256xf32>
    %88 = arith.negf %87 : vector<16x256xf32>
    %89 = math.exp %88 : vector<16x256xf32>
    %cst_50 = arith.constant 1.000000e+00 : f32
    %90 = vector.broadcast %cst_50 : f32 to vector<16x256xf32>
    %91 = arith.addf %90, %89 : vector<16x256xf32>
    %92 = arith.divf %90, %91 : vector<16x256xf32>
    %93 = arith.mulf %87, %92 : vector<16x256xf32>
    %cst_51 = arith.constant 0.000000e+00 : f32
    %94 = vector.broadcast %cst_51 : f32 to vector<8x256xf32>
    %c1_i32_52 = arith.constant 1 : i32
    %95 = tpu.dynamic_rotate %93 by %c1_i32_52 dim 1 : vector<16x256xf32>, i32 -> vector<16x256xf32>
    %c1_i32_53 = arith.constant 1 : i32
    %96 = vector.broadcast %c1_i32_53 : i32 to vector<1x256xi32>
    %97 = arith.cmpi sge, %25, %96 : vector<1x256xi32>
    %cst_54 = arith.constant 0.000000e+00 : f32
    %98 = vector.shape_cast %97 : vector<1x256xi1> to vector<1x256xi1>
    %99 = vector.broadcast %98 : vector<1x256xi1> to vector<16x256xi1>
    %100 = vector.broadcast %cst_54 : f32 to vector<16x256xf32>
    %101 = arith.select %99, %95, %100 : vector<16x256xi1>, vector<16x256xf32>
    %c0_55 = arith.constant 0 : index
    %c0_56 = arith.constant 0 : index
    %c0_57 = arith.constant 0 : index
    %102 = vector.load %arg9[%c0_55, %c0_56, %c0_57] : memref<3x8x16xf32, #tpu.memory_space<vmem>>, vector<1x8x16xf32>
    %103 = vector.shape_cast %102 : vector<1x8x16xf32> to vector<8x16xf32>
    %cst_58 = arith.constant dense<0.000000e+00> : vector<8x256xf32>
    %104 = tpu.matmul %103, %101, %cst_58 {dimension_numbers = #tpu.dot_dimension_numbers<[1], [0], [0], [1], [0, 0, 1, 1], [], []>} : vector<8x16xf32>, vector<16x256xf32>, vector<8x256xf32> -> vector<8x256xf32>
    %105 = arith.addf %94, %104 : vector<8x256xf32>
    %c1_59 = arith.constant 1 : index
    %c0_60 = arith.constant 0 : index
    %c0_61 = arith.constant 0 : index
    %106 = vector.load %arg9[%c1_59, %c0_60, %c0_61] : memref<3x8x16xf32, #tpu.memory_space<vmem>>, vector<1x8x16xf32>
    %107 = vector.shape_cast %106 : vector<1x8x16xf32> to vector<8x16xf32>
    %cst_62 = arith.constant dense<0.000000e+00> : vector<8x256xf32>
    %108 = tpu.matmul %107, %93, %cst_62 {dimension_numbers = #tpu.dot_dimension_numbers<[1], [0], [0], [1], [0, 0, 1, 1], [], []>} : vector<8x16xf32>, vector<16x256xf32>, vector<8x256xf32> -> vector<8x256xf32>
    %109 = arith.addf %105, %108 : vector<8x256xf32>
    %c255_i32_63 = arith.constant 255 : i32
    %110 = tpu.dynamic_rotate %93 by %c255_i32_63 dim 1 : vector<16x256xf32>, i32 -> vector<16x256xf32>
    %c31_i32_64 = arith.constant 31 : i32
    %111 = vector.broadcast %c31_i32_64 : i32 to vector<1x256xi32>
    %112 = arith.cmpi slt, %25, %111 : vector<1x256xi32>
    %cst_65 = arith.constant 0.000000e+00 : f32
    %113 = vector.shape_cast %112 : vector<1x256xi1> to vector<1x256xi1>
    %114 = vector.broadcast %113 : vector<1x256xi1> to vector<16x256xi1>
    %115 = vector.broadcast %cst_65 : f32 to vector<16x256xf32>
    %116 = arith.select %114, %110, %115 : vector<16x256xi1>, vector<16x256xf32>
    %c2_66 = arith.constant 2 : index
    %c0_67 = arith.constant 0 : index
    %c0_68 = arith.constant 0 : index
    %117 = vector.load %arg9[%c2_66, %c0_67, %c0_68] : memref<3x8x16xf32, #tpu.memory_space<vmem>>, vector<1x8x16xf32>
    %118 = vector.shape_cast %117 : vector<1x8x16xf32> to vector<8x16xf32>
    %cst_69 = arith.constant dense<0.000000e+00> : vector<8x256xf32>
    %119 = tpu.matmul %118, %116, %cst_69 {dimension_numbers = #tpu.dot_dimension_numbers<[1], [0], [0], [1], [0, 0, 1, 1], [], []>} : vector<8x16xf32>, vector<16x256xf32>, vector<8x256xf32> -> vector<8x256xf32>
    %120 = arith.addf %109, %119 : vector<8x256xf32>
    %c0_70 = arith.constant 0 : index
    %c0_71 = arith.constant 0 : index
    %121 = vector.load %arg10[%c0_70, %c0_71] : memref<8x1xf32, #tpu.memory_space<vmem>>, vector<8x1xf32>
    %122 = vector.broadcast %121 : vector<8x1xf32> to vector<8x256xf32>
    %123 = arith.addf %120, %122 : vector<8x256xf32>
    %124 = arith.negf %123 : vector<8x256xf32>
    %125 = math.exp %124 : vector<8x256xf32>
    %cst_72 = arith.constant 1.000000e+00 : f32
    %126 = vector.broadcast %cst_72 : f32 to vector<8x256xf32>
    %127 = arith.addf %126, %125 : vector<8x256xf32>
    %128 = arith.divf %126, %127 : vector<8x256xf32>
    %129 = arith.mulf %123, %128 : vector<8x256xf32>
    %cst_73 = arith.constant 0.000000e+00 : f32
    %130 = vector.broadcast %cst_73 : f32 to vector<1x256xf32>
    %c1_i32_74 = arith.constant 1 : i32
    %131 = tpu.dynamic_rotate %129 by %c1_i32_74 dim 1 : vector<8x256xf32>, i32 -> vector<8x256xf32>
    %c1_i32_75 = arith.constant 1 : i32
    %132 = vector.broadcast %c1_i32_75 : i32 to vector<1x256xi32>
    %133 = arith.cmpi sge, %25, %132 : vector<1x256xi32>
    %cst_76 = arith.constant 0.000000e+00 : f32
    %134 = vector.shape_cast %133 : vector<1x256xi1> to vector<1x256xi1>
    %135 = vector.broadcast %134 : vector<1x256xi1> to vector<8x256xi1>
    %136 = vector.broadcast %cst_76 : f32 to vector<8x256xf32>
    %137 = arith.select %135, %131, %136 : vector<8x256xi1>, vector<8x256xf32>
    %c0_77 = arith.constant 0 : index
    %c0_78 = arith.constant 0 : index
    %c0_79 = arith.constant 0 : index
    %138 = vector.load %arg11[%c0_77, %c0_78, %c0_79] : memref<3x1x8xf32, #tpu.memory_space<vmem>>, vector<1x1x8xf32>
    %139 = vector.shape_cast %138 : vector<1x1x8xf32> to vector<1x8xf32>
    %cst_80 = arith.constant dense<0.000000e+00> : vector<1x256xf32>
    %140 = tpu.matmul %139, %137, %cst_80 {dimension_numbers = #tpu.dot_dimension_numbers<[1], [0], [0], [1], [0, 0, 1, 1], [], []>} : vector<1x8xf32>, vector<8x256xf32>, vector<1x256xf32> -> vector<1x256xf32>
    %141 = arith.addf %130, %140 : vector<1x256xf32>
    %c1_81 = arith.constant 1 : index
    %c0_82 = arith.constant 0 : index
    %c0_83 = arith.constant 0 : index
    %142 = vector.load %arg11[%c1_81, %c0_82, %c0_83] : memref<3x1x8xf32, #tpu.memory_space<vmem>>, vector<1x1x8xf32>
    %143 = vector.shape_cast %142 : vector<1x1x8xf32> to vector<1x8xf32>
    %cst_84 = arith.constant dense<0.000000e+00> : vector<1x256xf32>
    %144 = tpu.matmul %143, %129, %cst_84 {dimension_numbers = #tpu.dot_dimension_numbers<[1], [0], [0], [1], [0, 0, 1, 1], [], []>} : vector<1x8xf32>, vector<8x256xf32>, vector<1x256xf32> -> vector<1x256xf32>
    %145 = arith.addf %141, %144 : vector<1x256xf32>
    %c255_i32_85 = arith.constant 255 : i32
    %146 = tpu.dynamic_rotate %129 by %c255_i32_85 dim 1 : vector<8x256xf32>, i32 -> vector<8x256xf32>
    %c31_i32_86 = arith.constant 31 : i32
    %147 = vector.broadcast %c31_i32_86 : i32 to vector<1x256xi32>
    %148 = arith.cmpi slt, %25, %147 : vector<1x256xi32>
    %cst_87 = arith.constant 0.000000e+00 : f32
    %149 = vector.shape_cast %148 : vector<1x256xi1> to vector<1x256xi1>
    %150 = vector.broadcast %149 : vector<1x256xi1> to vector<8x256xi1>
    %151 = vector.broadcast %cst_87 : f32 to vector<8x256xf32>
    %152 = arith.select %150, %146, %151 : vector<8x256xi1>, vector<8x256xf32>
    %c2_88 = arith.constant 2 : index
    %c0_89 = arith.constant 0 : index
    %c0_90 = arith.constant 0 : index
    %153 = vector.load %arg11[%c2_88, %c0_89, %c0_90] : memref<3x1x8xf32, #tpu.memory_space<vmem>>, vector<1x1x8xf32>
    %154 = vector.shape_cast %153 : vector<1x1x8xf32> to vector<1x8xf32>
    %cst_91 = arith.constant dense<0.000000e+00> : vector<1x256xf32>
    %155 = tpu.matmul %154, %152, %cst_91 {dimension_numbers = #tpu.dot_dimension_numbers<[1], [0], [0], [1], [0, 0, 1, 1], [], []>} : vector<1x8xf32>, vector<8x256xf32>, vector<1x256xf32> -> vector<1x256xf32>
    %156 = arith.addf %145, %155 : vector<1x256xf32>
    %c0_92 = arith.constant 0 : index
    %c0_93 = arith.constant 0 : index
    %157 = vector.load %arg12[%c0_92, %c0_93] : memref<1x1xf32, #tpu.memory_space<vmem>>, vector<1x1xf32>
    %158 = vector.broadcast %157 : vector<1x1xf32> to vector<1x256xf32>
    %159 = arith.addf %156, %158 : vector<1x256xf32>
    %160 = arith.subf %159, %0 : vector<1x256xf32>
    %161 = arith.mulf %160, %160 : vector<1x256xf32>
    %162 = vector.shape_cast %161 : vector<1x256xf32> to vector<1x1x256xf32>
    %cst_94 = arith.constant dense<0.000000e+00> : vector<1xf32>
    %163 = vector.multi_reduction <add>, %162, %cst_94 [1, 2] : vector<1x1x256xf32> to vector<1xf32>
    %164 = vector.shape_cast %163 : vector<1xf32> to vector<1x1x1xf32>
    %165 = vector.extract %164[0, 0, 0] : f32 from vector<1x1x1xf32>
    %cst_95 = arith.constant 3.906250e-03 : f32
    %166 = arith.mulf %165, %cst_95 : f32
    %c0_96 = arith.constant 0 : index
    %c0_97 = arith.constant 0 : index
    %167 = memref.load %arg13[%c0_96, %c0_97] : memref<1x1xf32, #tpu.memory_space<smem>>
    memref.store %166, %arg13[%c0_96, %c0_97] : memref<1x1xf32, #tpu.memory_space<smem>>
    return
  }
}

</mosaic_0001>

<llo_original>
// kernel: _pdiff_forward.1
$region0: #{_pdiff_forward.1}
  #allocation0 [shape = 'u32[]', space=smem, size = 0x4, offset = 0x4, fixed_abs, tag = 'smem constant byte address 0x4 - core index']
  #allocation1 [shape = 'u32[144,128]{1,0:T(1,128)}', space=vmem, size = 0x12000, scoped, tag = 'internal scratch']
  #allocation2 [shape = 'f32[1,1]{1,0:T(1,128)S(1)}', space=vmem, size = 0x200, scoped, tag = 'scoped memory for _pdiff_forward.1']
  %s0 = inlined_call_operand.vmem [shape: f32[1,256], index: 0, kind: input, shape index: {}]
  %s1 = inlined_call_operand.vmem [shape: f32[1,256], index: 1, kind: input, shape index: {}]
  %s2 = inlined_call_operand.vmem [shape: f32[1,256], index: 2, kind: input, shape index: {}]
  %s3 = inlined_call_operand.vmem [shape: f32[1,256], index: 3, kind: input, shape index: {}]
  %s4 = inlined_call_operand.vmem [shape: f32[1,256], index: 4, kind: input, shape index: {}]
  %s5 = inlined_call_operand.vmem [shape: f32[3,8,1], index: 5, kind: input, shape index: {}]
  %s6 = inlined_call_operand.vmem [shape: f32[8,1], index: 6, kind: input, shape index: {}]
  %s7 = inlined_call_operand.vmem [shape: f32[3,16,8], index: 7, kind: input, shape index: {}]
  %s8 = inlined_call_operand.vmem [shape: f32[16,1], index: 8, kind: input, shape index: {}]
  %s9 = inlined_call_operand.vmem [shape: f32[3,8,16], index: 9, kind: input, shape index: {}]
  %s10 = inlined_call_operand.vmem [shape: f32[8,1], index: 10, kind: input, shape index: {}]
  %s11 = inlined_call_operand.vmem [shape: f32[3,1,8], index: 11, kind: input, shape index: {}]
  %s12 = inlined_call_operand.<no memory space> [shape: f32[1,1], index: 12, kind: input, shape index: {}]
  %s13 = inlined_call_operand.hbm [shape: f32[1,1], index: 13, kind: output, shape index: {}]
  %s14 = sld [smem:[#allocation0]]
  $region62: #{_pdiff_forward.1} parent=0
    _
  %s16 = ssub.s32 1, %s14
  %s17 = scalar_select 0, %s16, %s14
  %v18 = vstv %s12
  %19 = vst [vmem:[#allocation2] sm:$0x1] %v18
  $region1: #{_pdiff_forward.1} parent=0
    #allocation3 [shape = 'u8[512]{0}', space=smem, size = 0x200, scoped, tag = 'output window, operand 0, single buffered']
    #allocation4 [shape = 's32[1]{0}', space=sflag, size = 0x4, scoped, tag = 'scoped memory for _pdiff_forward.1']
    %20 = vsyncpa [#allocation4], 0
    // Predicated region
    $region2: #{_pdiff_forward.1} parent=1 // pred_check
      _
    $region3: #{_pdiff_forward.1} parent=1 // pred_check_branch
      %22 = sbr.rel (0) target = $region5
    $region4: #{_pdiff_forward.1} parent=1 // pred_region
      _
    $region5: #{_pdiff_forward.1} parent=1 // pred_fallthru
      _
    // Predicated region
    $region6: #{_pdiff_forward.1} parent=1 // pred_check
      _
    $region7: #{_pdiff_forward.1} parent=1 // pred_check_branch
      %24 = sbr.rel (0) target = $region9
    $region8: #{_pdiff_forward.1} parent=1 // pred_region
      _
    $region9: #{_pdiff_forward.1} parent=1 // pred_fallthru
      _
    // Predicated region
    $region10: #{_pdiff_forward.1} parent=1 // pred_check
      _
    $region11: #{_pdiff_forward.1} parent=1 // pred_check_branch
      %26 = sbr.rel (0) target = $region13
    $region12: #{_pdiff_forward.1} parent=1 // pred_region
      _
    $region13: #{_pdiff_forward.1} parent=1 // pred_fallthru
      _
    // Predicated region
    $region14: #{_pdiff_forward.1} parent=1 // pred_check
      _
    $region15: #{_pdiff_forward.1} parent=1 // pred_check_branch
      %28 = sbr.rel (0) target = $region17
    $region16: #{_pdiff_forward.1} parent=1 // pred_region
      _
    $region17: #{_pdiff_forward.1} parent=1 // pred_fallthru
      _
    // Predicated region
    $region18: #{_pdiff_forward.1} parent=1 // pred_check
      _
    $region19: #{_pdiff_forward.1} parent=1 // pred_check_branch
      %30 = sbr.rel (0) target = $region21
    $region20: #{_pdiff_forward.1} parent=1 // pred_region
      _
    $region21: #{_pdiff_forward.1} parent=1 // pred_fallthru
      _
    // Predicated region
    $region22: #{_pdiff_forward.1} parent=1 // pred_check
      _
    $region23: #{_pdiff_forward.1} parent=1 // pred_check_branch
      %32 = sbr.rel (0) target = $region25
    $region24: #{_pdiff_forward.1} parent=1 // pred_region
      _
    $region25: #{_pdiff_forward.1} parent=1 // pred_fallthru
      _
    // Predicated region
    $region26: #{_pdiff_forward.1} parent=1 // pred_check
      _
    $region27: #{_pdiff_forward.1} parent=1 // pred_check_branch
      %34 = sbr.rel (0) target = $region29
    $region28: #{_pdiff_forward.1} parent=1 // pred_region
      _
    $region29: #{_pdiff_forward.1} parent=1 // pred_fallthru
      _
    // Predicated region
    $region30: #{_pdiff_forward.1} parent=1 // pred_check
      _
    $region31: #{_pdiff_forward.1} parent=1 // pred_check_branch
      %36 = sbr.rel (0) target = $region33
    $region32: #{_pdiff_forward.1} parent=1 // pred_region
      _
    $region33: #{_pdiff_forward.1} parent=1 // pred_fallthru
      _
    // Predicated region
    $region34: #{_pdiff_forward.1} parent=1 // pred_check
      _
    $region35: #{_pdiff_forward.1} parent=1 // pred_check_branch
      %38 = sbr.rel (0) target = $region37
    $region36: #{_pdiff_forward.1} parent=1 // pred_region
      _
    $region37: #{_pdiff_forward.1} parent=1 // pred_fallthru
      _
    // Predicated region
    $region38: #{_pdiff_forward.1} parent=1 // pred_check
      _
    $region39: #{_pdiff_forward.1} parent=1 // pred_check_branch
      %40 = sbr.rel (0) target = $region41
    $region40: #{_pdiff_forward.1} parent=1 // pred_region
      _
    $region41: #{_pdiff_forward.1} parent=1 // pred_fallthru
      _
    // Predicated region
    $region42: #{_pdiff_forward.1} parent=1 // pred_check
      _
    $region43: #{_pdiff_forward.1} parent=1 // pred_check_branch
      %42 = sbr.rel (0) target = $region45
    $region44: #{_pdiff_forward.1} parent=1 // pred_region
      _
    $region45: #{_pdiff_forward.1} parent=1 // pred_fallthru
      _
    // Predicated region
    $region46: #{_pdiff_forward.1} parent=1 // pred_check
      _
    $region47: #{_pdiff_forward.1} parent=1 // pred_check_branch
      %44 = sbr.rel (0) target = $region49
    $region48: #{_pdiff_forward.1} parent=1 // pred_region
      _
    $region49: #{_pdiff_forward.1} parent=1 // pred_fallthru
      _
    // Predicated region
    $region50: #{_pdiff_forward.1} parent=1 // pred_check
      _
    $region51: #{_pdiff_forward.1} parent=1 // pred_check_branch
      %46 = sbr.rel (0) target = $region53
    $region52: #{_pdiff_forward.1} parent=1 // pred_region
      _
    $region53: #{_pdiff_forward.1} parent=1 // pred_fallthru
      _
    %v47 = vld [vmem:[%s1] sm:$0x3]
    %v48 = vld [vmem:[%s3] sm:$0x3]
    %v49 = vld [vmem:[%s0] sm:$0x3]
    %v50 = vmul.f32 %v48, %v49
    %v51 = vld [vmem:[%s4] sm:$0x3]
    %v52 = vmul.f32 %v51, %v47
    %v53 = vadd.f32 %v50, %v52
    %v54 = vld [vmem:[%s2] sm:$0x3]
    %v55 = vadd.f32 %v53, %v54
    %v56 = vlaneseq
    %v57 = vand.u32 %v56, 127
    %v58 = vadd.s32 %v57, 128
    %vm59 = vcmp.lt.s32.totalorder %v57, 0
    %v60 = vsub.s32 0, %v57
    %v61 = vsel %vm59, %v60, %v57
    %v62 = vshrl.u32 %v61, 5
    %v63 = vand.u32 %v61, 31
    %v64 = vsub.s32 0, %v63
    %v65 = vsel %vm59, %v64, %v63
    %vm66 = vcmp.lt.s32.totalorder %v58, 0
    %v67 = vsub.s32 0, %v58
    %v68 = vsel %vm66, %v67, %v58
    %v69 = vshrl.u32 %v68, 5
    %v70 = vand.u32 %v68, 31
    %v71 = vsub.s32 0, %v70
    %v72 = vsel %vm66, %v71, %v70
    %vm73 = vcmp.ne.s32.totalorder %v65, 0
    %vm74 = vcmp.ne.s32.totalorder %v72, 0
    %vm75 = vcmp.lt.s32.totalorder %v65, 0
    %vm76 = vcmp.lt.s32.totalorder %v72, 0
    %vm77 = vmand %vm75, %vm73
    %vm78 = vmand %vm76, %vm74
    %v79 = vadd.s32 %v65, 32
    %v80 = vadd.s32 %v72, 32
    %v81 = vsel %vm77, %v79, %v65
    %v82 = vsel %vm78, %v80, %v72
    %v84 = vlaneseq
    %v85 = vshrl.u32 %v84, 7
    %v86 = vsub.s32 0, %v85
    %v87 = vrot.slane %v55, %v86
    %v88 = vlaneseq
    %v89 = vshrl.u32 %v88, 7
    %v90 = vsub.s32 1, %v89
    %v91 = vrot.slane %v55, %v90
    %94 = vrot.lane.b32.xlu0 %v87, 1
    %v95 = vpop.permute.xlu0 %94
    %96 = vrot.lane.b32.xlu0 %v91, 1
    %v97 = vpop.permute.xlu0 %96
    %vm98 = vcmp.lt.s32.totalorder %v57, 1
    %v99 = vsel %vm98, %v95, %v97
    %v100 = vsel %vm98, %v97, %v95
    %vm101 = vcmp.ge.s32.totalorder %v81, 1
    %vm102 = vcmp.ge.s32.totalorder %v82, 1
    %v103 = vsel %vm101, %v100, 0.0
    %v104 = vsel %vm102, %v99, 0.0
    %v105 = vld [vmem:[%s5] sm:$0xff]
    %s106 = scalar_lea.vmem %s5, 8
    %v107 = vld [vmem:[%s106] sm:$0xff]
    %vm108 = vcmask 7168
    %v110 = vsel %vm108, %v107, 0
    %vm112 = vcmask 1040384
    %v113 = vsel %vm112, %v87, 0
    %v115 = vsel %vm112, %v91, 0
    %117 = vmatprep.subr.mxu0 %v115
    %118 = vmatpush1.msra.mxu0 %v113
    %119 = vmatprep.subr.mxu0 0.0
    %120 = vmatpush1.msra.mxu0 0.0
    %121 = vmatprep.subr.mxu0 0.0
    %122 = vmatpush1.msra.mxu0 0.0
    %123 = vmatprep.subr.mxu0 0.0
    %124 = vmatpush1.msra.mxu0 0.0
    %125 = vmatprep.subr.mxu0 0.0
    %126 = vmatpush1.msra.mxu0 0.0
    %127 = vmatprep.subr.mxu0 0.0
    %128 = vmatpush1.msra.mxu0 0.0
    %129 = vmatprep.subr.mxu0 0.0
    %130 = vmatpush1.msra.mxu0 0.0
    %131 = vmatprep.subr.mxu0 0.0
    %132 = vmatpush1.msra.mxu0 0.0
    %133 = vmatprep.subr.mxu0 0.0
    %134 = vmatpush1.msra.mxu0 0.0
    %135 = vmatprep.subr.mxu0 0.0
    %136 = vmatpush1.msra.mxu0 0.0
    %137 = vmatprep.subr.mxu0 0.0
    %138 = vmatpush1.msra.mxu0 0.0
    %139 = vmatprep.subr.mxu0 0.0
    %140 = vmatpush1.msra.mxu0 0.0
    %141 = vmatprep.subr.mxu0 0.0
    %142 = vmatpush1.msra.mxu0 0.0
    %143 = vmatprep.subr.mxu0 0.0
    %144 = vmatpush1.msra.mxu0 0.0
    %145 = vmatprep.subr.mxu0 0.0
    %146 = vmatpush1.msra.mxu0 0.0
    %147 = vmatprep.subr.mxu0 0.0
    %148 = vmatpush1.msra.mxu0 0.0
    %149 = vmatprep.subr.mxu0 0.0
    %150 = vmatpush1.msra.mxu0 0.0
    %151 = vmatprep.subr.mxu0 0.0
    %152 = vmatpush1.msra.mxu0 0.0
    %153 = vmatprep.subr.mxu0 0.0
    %154 = vmatpush1.msra.mxu0 0.0
    %155 = vmatprep.subr.mxu0 0.0
    %156 = vmatpush1.msra.mxu0 0.0
    %157 = vmatprep.subr.mxu0 0.0
    %158 = vmatpush1.msra.mxu0 0.0
    %159 = vmatprep.subr.mxu0 0.0
    %160 = vmatpush1.msra.mxu0 0.0
    %161 = vmatprep.subr.mxu0 0.0
    %162 = vmatpush1.msra.mxu0 0.0
    %163 = vmatprep.subr.mxu0 0.0
    %164 = vmatpush1.msra.mxu0 0.0
    %165 = vmatprep.subr.mxu0 0.0
    %166 = vmatpush1.msra.mxu0 0.0
    %167 = vmatprep.subr.mxu0 0.0
    %168 = vmatpush1.msra.mxu0 0.0
    %169 = vmatprep.subr.mxu0 0.0
    %170 = vmatpush1.msra.mxu0 0.0
    %171 = vmatprep.subr.mxu0 0.0
    %172 = vmatpush1.msra.mxu0 0.0
    %173 = vmatprep.subr.mxu0 0.0
    %174 = vmatpush1.msra.mxu0 0.0
    %175 = vmatprep.subr.mxu0 0.0
    %176 = vmatpush1.msra.mxu0 0.0
    %177 = vmatprep.subr.mxu0 0.0
    %178 = vmatpush1.msra.mxu0 0.0
    %179 = vmatprep.subr.mxu0 0.0
    %180 = vmatpush1.msra.mxu0 0.0
    %181 = vmatprep.mubr.f32.mxu0 0.0
    %182 = vmatmul.mubr.f32.gmra.mrb[0].mxu0 %v110
    %v183 = vpop.f32.mrb[0].mxu0
    %v184 = vadd.f32 0.0, %v183
    %v185 = vpop.f32.mrb[0].mxu0
    %v186 = vadd.f32 0.0, %v185
    %187 = vdwg.mxu0
    %v189 = vsel %vm108, %v105, 0
    %v192 = vsel %vm112, %v103, 0
    %v195 = vsel %vm112, %v104, 0
    %197 = vmatprep.subr.mxu0 %v195
    %198 = vmatpush1.msra.mxu0 %v192
    %199 = vmatprep.subr.mxu0 0.0
    %200 = vmatpush1.msra.mxu0 0.0
    %201 = vmatprep.subr.mxu0 0.0
    %202 = vmatpush1.msra.mxu0 0.0
    %203 = vmatprep.subr.mxu0 0.0
    %204 = vmatpush1.msra.mxu0 0.0
    %205 = vmatprep.subr.mxu0 0.0
    %206 = vmatpush1.msra.mxu0 0.0
    %207 = vmatprep.subr.mxu0 0.0
    %208 = vmatpush1.msra.mxu0 0.0
    %209 = vmatprep.subr.mxu0 0.0
    %210 = vmatpush1.msra.mxu0 0.0
    %211 = vmatprep.subr.mxu0 0.0
    %212 = vmatpush1.msra.mxu0 0.0
    %213 = vmatprep.subr.mxu0 0.0
    %214 = vmatpush1.msra.mxu0 0.0
    %215 = vmatprep.subr.mxu0 0.0
    %216 = vmatpush1.msra.mxu0 0.0
    %217 = vmatprep.subr.mxu0 0.0
    %218 = vmatpush1.msra.mxu0 0.0
    %219 = vmatprep.subr.mxu0 0.0
    %220 = vmatpush1.msra.mxu0 0.0
    %221 = vmatprep.subr.mxu0 0.0
    %222 = vmatpush1.msra.mxu0 0.0
    %223 = vmatprep.subr.mxu0 0.0
    %224 = vmatpush1.msra.mxu0 0.0
    %225 = vmatprep.subr.mxu0 0.0
    %226 = vmatpush1.msra.mxu0 0.0
    %227 = vmatprep.subr.mxu0 0.0
    %228 = vmatpush1.msra.mxu0 0.0
    %229 = vmatprep.subr.mxu0 0.0
    %230 = vmatpush1.msra.mxu0 0.0
    %231 = vmatprep.subr.mxu0 0.0
    %232 = vmatpush1.msra.mxu0 0.0
    %233 = vmatprep.subr.mxu0 0.0
    %234 = vmatpush1.msra.mxu0 0.0
    %235 = vmatprep.subr.mxu0 0.0
    %236 = vmatpush1.msra.mxu0 0.0
    %237 = vmatprep.subr.mxu0 0.0
    %238 = vmatpush1.msra.mxu0 0.0
    %239 = vmatprep.subr.mxu0 0.0
    %240 = vmatpush1.msra.mxu0 0.0
    %241 = vmatprep.subr.mxu0 0.0
    %242 = vmatpush1.msra.mxu0 0.0
    %243 = vmatprep.subr.mxu0 0.0
    %244 = vmatpush1.msra.mxu0 0.0
    %245 = vmatprep.subr.mxu0 0.0
    %246 = vmatpush1.msra.mxu0 0.0
    %247 = vmatprep.subr.mxu0 0.0
    %248 = vmatpush1.msra.mxu0 0.0
    %249 = vmatprep.subr.mxu0 0.0
    %250 = vmatpush1.msra.mxu0 0.0
    %251 = vmatprep.subr.mxu0 0.0
    %252 = vmatpush1.msra.mxu0 0.0
    %253 = vmatprep.subr.mxu0 0.0
    %254 = vmatpush1.msra.mxu0 0.0
    %255 = vmatprep.subr.mxu0 0.0
    %256 = vmatpush1.msra.mxu0 0.0
    %257 = vmatprep.subr.mxu0 0.0
    %258 = vmatpush1.msra.mxu0 0.0
    %259 = vmatprep.subr.mxu0 0.0
    %260 = vmatpush1.msra.mxu0 0.0
    %261 = vmatprep.mubr.f32.mxu0 0.0
    %262 = vmatmul.mubr.f32.gmra.mrb[0].mxu0 %v189
    %v263 = vpop.f32.mrb[0].mxu0
    %v264 = vadd.f32 %v184, %v263
    %v265 = vpop.f32.mrb[0].mxu0
    %v266 = vadd.f32 %v186, %v265
    %267 = vdwg.mxu0
    %268 = vrot.lane.b32.xlu0 %v87, 127
    %v269 = vpop.permute.xlu0 %268
    %270 = vrot.lane.b32.xlu0 %v91, 127
    %v271 = vpop.permute.xlu0 %270
    %vm272 = vcmp.lt.s32.totalorder %v57, 127
    %v273 = vsel %vm272, %v269, %v271
    %v274 = vsel %vm272, %v271, %v269
    %vm275 = vcmp.lt.s32.totalorder %v81, 31
    %vm276 = vcmp.lt.s32.totalorder %v82, 31
    %v277 = vsel %vm275, %v273, 0.0
    %v278 = vsel %vm276, %v274, 0.0
    %s279 = scalar_lea.vmem %s5, 16
    %v280 = vld [vmem:[%s279] sm:$0xff]
    %v282 = vsel %vm108, %v280, 0
    %v285 = vsel %vm112, %v277, 0
    %v288 = vsel %vm112, %v278, 0
    %290 = vmatprep.subr.mxu0 %v288
    %291 = vmatpush1.msra.mxu0 %v285
    %292 = vmatprep.subr.mxu0 0.0
    %293 = vmatpush1.msra.mxu0 0.0
    %294 = vmatprep.subr.mxu0 0.0
    %295 = vmatpush1.msra.mxu0 0.0
    %296 = vmatprep.subr.mxu0 0.0
    %297 = vmatpush1.msra.mxu0 0.0
    %298 = vmatprep.subr.mxu0 0.0
    %299 = vmatpush1.msra.mxu0 0.0
    %300 = vmatprep.subr.mxu0 0.0
    %301 = vmatpush1.msra.mxu0 0.0
    %302 = vmatprep.subr.mxu0 0.0
    %303 = vmatpush1.msra.mxu0 0.0
    %304 = vmatprep.subr.mxu0 0.0
    %305 = vmatpush1.msra.mxu0 0.0
    %306 = vmatprep.subr.mxu0 0.0
    %307 = vmatpush1.msra.mxu0 0.0
    %308 = vmatprep.subr.mxu0 0.0
    %309 = vmatpush1.msra.mxu0 0.0
    %310 = vmatprep.subr.mxu0 0.0
    %311 = vmatpush1.msra.mxu0 0.0
    %312 = vmatprep.subr.mxu0 0.0
    %313 = vmatpush1.msra.mxu0 0.0
    %314 = vmatprep.subr.mxu0 0.0
    %315 = vmatpush1.msra.mxu0 0.0
    %316 = vmatprep.subr.mxu0 0.0
    %317 = vmatpush1.msra.mxu0 0.0
    %318 = vmatprep.subr.mxu0 0.0
    %319 = vmatpush1.msra.mxu0 0.0
    %320 = vmatprep.subr.mxu0 0.0
    %321 = vmatpush1.msra.mxu0 0.0
    %322 = vmatprep.subr.mxu0 0.0
    %323 = vmatpush1.msra.mxu0 0.0
    %324 = vmatprep.subr.mxu0 0.0
    %325 = vmatpush1.msra.mxu0 0.0
    %326 = vmatprep.subr.mxu0 0.0
    %327 = vmatpush1.msra.mxu0 0.0
    %328 = vmatprep.subr.mxu0 0.0
    %329 = vmatpush1.msra.mxu0 0.0
    %330 = vmatprep.subr.mxu0 0.0
    %331 = vmatpush1.msra.mxu0 0.0
    %332 = vmatprep.subr.mxu0 0.0
    %333 = vmatpush1.msra.mxu0 0.0
    %334 = vmatprep.subr.mxu0 0.0
    %335 = vmatpush1.msra.mxu0 0.0
    %336 = vmatprep.subr.mxu0 0.0
    %337 = vmatpush1.msra.mxu0 0.0
    %338 = vmatprep.subr.mxu0 0.0
    %339 = vmatpush1.msra.mxu0 0.0
    %340 = vmatprep.subr.mxu0 0.0
    %341 = vmatpush1.msra.mxu0 0.0
    %342 = vmatprep.subr.mxu0 0.0
    %343 = vmatpush1.msra.mxu0 0.0
    %344 = vmatprep.subr.mxu0 0.0
    %345 = vmatpush1.msra.mxu0 0.0
    %346 = vmatprep.subr.mxu0 0.0
    %347 = vmatpush1.msra.mxu0 0.0
    %348 = vmatprep.subr.mxu0 0.0
    %349 = vmatpush1.msra.mxu0 0.0
    %350 = vmatprep.subr.mxu0 0.0
    %351 = vmatpush1.msra.mxu0 0.0
    %352 = vmatprep.subr.mxu0 0.0
    %353 = vmatpush1.msra.mxu0 0.0
    %354 = vmatprep.mubr.f32.mxu0 0.0
    %355 = vmatmul.mubr.f32.gmra.mrb[0].mxu0 %v282
    %v356 = vpop.f32.mrb[0].mxu0
    %v357 = vadd.f32 0.0, %v356
    %v358 = vpop.f32.mrb[0].mxu0
    %v359 = vadd.f32 0.0, %v358
    %360 = vdwg.mxu0
    %v361 = vadd.f32 %v264, %v357
    %v362 = vadd.f32 %v266, %v359
    %v363 = vld [vmem:[%s6] sm:$0xff]
    %365 = vset.pattern.permute.xlu0 0
    %366 = vperm.xlu0 %365, %v363
    %v367 = vpop.permute.xlu0 %366
    %v369 = vadd.f32 %v361, %v367
    %v370 = vadd.f32 %v362, %v367
    %v371 = vxor.u32 %v369, 2147483648
    %v372 = vxor.u32 %v370, 2147483648
    %v373 = vmul.f32 %v371, 1.442695
    %v374 = vpow.pop %v373
    %v375 = vmul.f32 %v372, 1.442695
    %v376 = vpow.pop %v375
    %v377 = vadd.f32 %v374, 1.0
    %v378 = vadd.f32 %v376, 1.0
    %v379 = vrcp.pop %v377
    %v380 = vmul.f32 1.0, %v379
    %v381 = vrcp.pop %v378
    %v382 = vmul.f32 1.0, %v381
    %v383 = vmul.f32 %v369, %v380
    %v384 = vmul.f32 %v370, %v382
    %385 = vrot.lane.b32.xlu0 %v383, 1
    %v386 = vpop.permute.xlu0 %385
    %387 = vrot.lane.b32.xlu0 %v384, 1
    %v388 = vpop.permute.xlu0 %387
    %v389 = vsel %vm98, %v386, %v388
    %v390 = vsel %vm98, %v388, %v386
    %v391 = vsel %vm101, 1, 0
    %v392 = vsel %vm102, 1, 0
    %vm393 = vcmp.eq.s32.totalorder %v391, 1
    %vm394 = vcmp.eq.s32.totalorder %v392, 1
    %v395 = vsel %vm393, %v390, 0.0
    %v396 = vsel %vm394, %v389, 0.0
    %v397 = vld [vmem:[%s7] sm:$0xff]
    %v398 = vld [vmem:[%s7 + $0x8] sm:$0xff]
    %s399 = scalar_lea.vmem %s7, 16
    %v400 = vld [vmem:[%s399] sm:$0xff]
    %v401 = vld [vmem:[%s399 + $0x8] sm:$0xff]
    %vm402 = vcmask 64512
    %v404 = vsel %vm402, %v400, 0
    %v407 = vsel %vm402, %v401, 0
    %409 = vmatprep.subr.mxu0 %v384
    %410 = vmatpush1.msra.mxu0 %v383
    %411 = vmatprep.subr.mxu0 0.0
    %412 = vmatpush1.msra.mxu0 0.0
    %413 = vmatprep.subr.mxu0 0.0
    %414 = vmatpush1.msra.mxu0 0.0
    %415 = vmatprep.subr.mxu0 0.0
    %416 = vmatpush1.msra.mxu0 0.0
    %417 = vmatprep.subr.mxu0 0.0
    %418 = vmatpush1.msra.mxu0 0.0
    %419 = vmatprep.subr.mxu0 0.0
    %420 = vmatpush1.msra.mxu0 0.0
    %421 = vmatprep.subr.mxu0 0.0
    %422 = vmatpush1.msra.mxu0 0.0
    %423 = vmatprep.subr.mxu0 0.0
    %424 = vmatpush1.msra.mxu0 0.0
    %425 = vmatprep.subr.mxu0 0.0
    %426 = vmatpush1.msra.mxu0 0.0
    %427 = vmatprep.subr.mxu0 0.0
    %428 = vmatpush1.msra.mxu0 0.0
    %429 = vmatprep.subr.mxu0 0.0
    %430 = vmatpush1.msra.mxu0 0.0
    %431 = vmatprep.subr.mxu0 0.0
    %432 = vmatpush1.msra.mxu0 0.0
    %433 = vmatprep.subr.mxu0 0.0
    %434 = vmatpush1.msra.mxu0 0.0
    %435 = vmatprep.subr.mxu0 0.0
    %436 = vmatpush1.msra.mxu0 0.0
    %437 = vmatprep.subr.mxu0 0.0
    %438 = vmatpush1.msra.mxu0 0.0
    %439 = vmatprep.subr.mxu0 0.0
    %440 = vmatpush1.msra.mxu0 0.0
    %441 = vmatprep.subr.mxu0 0.0
    %442 = vmatpush1.msra.mxu0 0.0
    %443 = vmatprep.subr.mxu0 0.0
    %444 = vmatpush1.msra.mxu0 0.0
    %445 = vmatprep.subr.mxu0 0.0
    %446 = vmatpush1.msra.mxu0 0.0
    %447 = vmatprep.subr.mxu0 0.0
    %448 = vmatpush1.msra.mxu0 0.0
    %449 = vmatprep.subr.mxu0 0.0
    %450 = vmatpush1.msra.mxu0 0.0
    %451 = vmatprep.subr.mxu0 0.0
    %452 = vmatpush1.msra.mxu0 0.0
    %453 = vmatprep.subr.mxu0 0.0
    %454 = vmatpush1.msra.mxu0 0.0
    %455 = vmatprep.subr.mxu0 0.0
    %456 = vmatpush1.msra.mxu0 0.0
    %457 = vmatprep.subr.mxu0 0.0
    %458 = vmatpush1.msra.mxu0 0.0
    %459 = vmatprep.subr.mxu0 0.0
    %460 = vmatpush1.msra.mxu0 0.0
    %461 = vmatprep.subr.mxu0 0.0
    %462 = vmatpush1.msra.mxu0 0.0
    %463 = vmatprep.subr.mxu0 0.0
    %464 = vmatpush1.msra.mxu0 0.0
    %465 = vmatprep.subr.mxu0 0.0
    %466 = vmatpush1.msra.mxu0 0.0
    %467 = vmatprep.subr.mxu0 0.0
    %468 = vmatpush1.msra.mxu0 0.0
    %469 = vmatprep.subr.mxu0 0.0
    %470 = vmatpush1.msra.mxu0 0.0
    %471 = vmatprep.subr.mxu0 0.0
    %472 = vmatpush1.msra.mxu0 0.0
    %473 = vmatprep.mubr.f32.mxu0 0.0
    %474 = vmatmul.mubr.f32.gmra.mrb[0].mxu0 %v404
    %v475 = vpop.f32.mrb[0].mxu0
    %v476 = vadd.f32 0.0, %v475
    %v477 = vpop.f32.mrb[0].mxu0
    %v478 = vadd.f32 0.0, %v477
    %479 = vmatprep.mubr.f32.mxu0 0.0
    %480 = vmatmul.mubr.f32.gmra.mrb[0].mxu0 %v407
    %v481 = vpop.f32.mrb[0].mxu0
    %v482 = vadd.f32 0.0, %v481
    %v483 = vpop.f32.mrb[0].mxu0
    %v484 = vadd.f32 0.0, %v483
    %485 = vdwg.mxu0
    %v487 = vsel %vm402, %v397, 0
    %v490 = vsel %vm402, %v398, 0
    %492 = vmatprep.subr.mxu0 %v396
    %493 = vmatpush1.msra.mxu0 %v395
    %494 = vmatprep.subr.mxu0 0.0
    %495 = vmatpush1.msra.mxu0 0.0
    %496 = vmatprep.subr.mxu0 0.0
    %497 = vmatpush1.msra.mxu0 0.0
    %498 = vmatprep.subr.mxu0 0.0
    %499 = vmatpush1.msra.mxu0 0.0
    %500 = vmatprep.subr.mxu0 0.0
    %501 = vmatpush1.msra.mxu0 0.0
    %502 = vmatprep.subr.mxu0 0.0
    %503 = vmatpush1.msra.mxu0 0.0
    %504 = vmatprep.subr.mxu0 0.0
    %505 = vmatpush1.msra.mxu0 0.0
    %506 = vmatprep.subr.mxu0 0.0
    %507 = vmatpush1.msra.mxu0 0.0
    %508 = vmatprep.subr.mxu0 0.0
    %509 = vmatpush1.msra.mxu0 0.0
    %510 = vmatprep.subr.mxu0 0.0
    %511 = vmatpush1.msra.mxu0 0.0
    %512 = vmatprep.subr.mxu0 0.0
    %513 = vmatpush1.msra.mxu0 0.0
    %514 = vmatprep.subr.mxu0 0.0
    %515 = vmatpush1.msra.mxu0 0.0
    %516 = vmatprep.subr.mxu0 0.0
    %517 = vmatpush1.msra.mxu0 0.0
    %518 = vmatprep.subr.mxu0 0.0
    %519 = vmatpush1.msra.mxu0 0.0
    %520 = vmatprep.subr.mxu0 0.0
    %521 = vmatpush1.msra.mxu0 0.0
    %522 = vmatprep.subr.mxu0 0.0
    %523 = vmatpush1.msra.mxu0 0.0
    %524 = vmatprep.subr.mxu0 0.0
    %525 = vmatpush1.msra.mxu0 0.0
    %526 = vmatprep.subr.mxu0 0.0
    %527 = vmatpush1.msra.mxu0 0.0
    %528 = vmatprep.subr.mxu0 0.0
    %529 = vmatpush1.msra.mxu0 0.0
    %530 = vmatprep.subr.mxu0 0.0
    %531 = vmatpush1.msra.mxu0 0.0
    %532 = vmatprep.subr.mxu0 0.0
    %533 = vmatpush1.msra.mxu0 0.0
    %534 = vmatprep.subr.mxu0 0.0
    %535 = vmatpush1.msra.mxu0 0.0
    %536 = vmatprep.subr.mxu0 0.0
    %537 = vmatpush1.msra.mxu0 0.0
    %538 = vmatprep.subr.mxu0 0.0
    %539 = vmatpush1.msra.mxu0 0.0
    %540 = vmatprep.subr.mxu0 0.0
    %541 = vmatpush1.msra.mxu0 0.0
    %542 = vmatprep.subr.mxu0 0.0
    %543 = vmatpush1.msra.mxu0 0.0
    %544 = vmatprep.subr.mxu0 0.0
    %545 = vmatpush1.msra.mxu0 0.0
    %546 = vmatprep.subr.mxu0 0.0
    %547 = vmatpush1.msra.mxu0 0.0
    %548 = vmatprep.subr.mxu0 0.0
    %549 = vmatpush1.msra.mxu0 0.0
    %550 = vmatprep.subr.mxu0 0.0
    %551 = vmatpush1.msra.mxu0 0.0
    %552 = vmatprep.subr.mxu0 0.0
    %553 = vmatpush1.msra.mxu0 0.0
    %554 = vmatprep.subr.mxu0 0.0
    %555 = vmatpush1.msra.mxu0 0.0
    %556 = vmatprep.mubr.f32.mxu0 0.0
    %557 = vmatmul.mubr.f32.gmra.mrb[0].mxu0 %v487
    %v558 = vpop.f32.mrb[0].mxu0
    %v559 = vadd.f32 %v476, %v558
    %v560 = vpop.f32.mrb[0].mxu0
    %v561 = vadd.f32 %v478, %v560
    %562 = vmatprep.mubr.f32.mxu0 0.0
    %563 = vmatmul.mubr.f32.gmra.mrb[0].mxu0 %v490
    %v564 = vpop.f32.mrb[0].mxu0
    %v565 = vadd.f32 %v482, %v564
    %v566 = vpop.f32.mrb[0].mxu0
    %v567 = vadd.f32 %v484, %v566
    %568 = vdwg.mxu0
    %569 = vrot.lane.b32.xlu0 %v383, 127
    %v570 = vpop.permute.xlu0 %569
    %571 = vrot.lane.b32.xlu0 %v384, 127
    %v572 = vpop.permute.xlu0 %571
    %v573 = vsel %vm272, %v570, %v572
    %v574 = vsel %vm272, %v572, %v570
    %v575 = vsel %vm275, 1, 0
    %v576 = vsel %vm276, 1, 0
    %vm577 = vcmp.eq.s32.totalorder %v575, 1
    %vm578 = vcmp.eq.s32.totalorder %v576, 1
    %v579 = vsel %vm577, %v573, 0.0
    %v580 = vsel %vm578, %v574, 0.0
    %s581 = scalar_lea.vmem %s7, 32
    %v582 = vld [vmem:[%s581] sm:$0xff]
    %v583 = vld [vmem:[%s581 + $0x8] sm:$0xff]
    %v585 = vsel %vm402, %v582, 0
    %v588 = vsel %vm402, %v583, 0
    %590 = vmatprep.subr.mxu0 %v580
    %591 = vmatpush1.msra.mxu0 %v579
    %592 = vmatprep.subr.mxu0 0.0
    %593 = vmatpush1.msra.mxu0 0.0
    %594 = vmatprep.subr.mxu0 0.0
    %595 = vmatpush1.msra.mxu0 0.0
    %596 = vmatprep.subr.mxu0 0.0
    %597 = vmatpush1.msra.mxu0 0.0
    %598 = vmatprep.subr.mxu0 0.0
    %599 = vmatpush1.msra.mxu0 0.0
    %600 = vmatprep.subr.mxu0 0.0
    %601 = vmatpush1.msra.mxu0 0.0
    %602 = vmatprep.subr.mxu0 0.0
    %603 = vmatpush1.msra.mxu0 0.0
    %604 = vmatprep.subr.mxu0 0.0
    %605 = vmatpush1.msra.mxu0 0.0
    %606 = vmatprep.subr.mxu0 0.0
    %607 = vmatpush1.msra.mxu0 0.0
    %608 = vmatprep.subr.mxu0 0.0
    %609 = vmatpush1.msra.mxu0 0.0
    %610 = vmatprep.subr.mxu0 0.0
    %611 = vmatpush1.msra.mxu0 0.0
    %612 = vmatprep.subr.mxu0 0.0
    %613 = vmatpush1.msra.mxu0 0.0
    %614 = vmatprep.subr.mxu0 0.0
    %615 = vmatpush1.msra.mxu0 0.0
    %616 = vmatprep.subr.mxu0 0.0
    %617 = vmatpush1.msra.mxu0 0.0
    %618 = vmatprep.subr.mxu0 0.0
    %619 = vmatpush1.msra.mxu0 0.0
    %620 = vmatprep.subr.mxu0 0.0
    %621 = vmatpush1.msra.mxu0 0.0
    %622 = vmatprep.subr.mxu0 0.0
    %623 = vmatpush1.msra.mxu0 0.0
    %624 = vmatprep.subr.mxu0 0.0
    %625 = vmatpush1.msra.mxu0 0.0
    %626 = vmatprep.subr.mxu0 0.0
    %627 = vmatpush1.msra.mxu0 0.0
    %628 = vmatprep.subr.mxu0 0.0
    %629 = vmatpush1.msra.mxu0 0.0
    %630 = vmatprep.subr.mxu0 0.0
    %631 = vmatpush1.msra.mxu0 0.0
    %632 = vmatprep.subr.mxu0 0.0
    %633 = vmatpush1.msra.mxu0 0.0
    %634 = vmatprep.subr.mxu0 0.0
    %635 = vmatpush1.msra.mxu0 0.0
    %636 = vmatprep.subr.mxu0 0.0
    %637 = vmatpush1.msra.mxu0 0.0
    %638 = vmatprep.subr.mxu0 0.0
    %639 = vmatpush1.msra.mxu0 0.0
    %640 = vmatprep.subr.mxu0 0.0
    %641 = vmatpush1.msra.mxu0 0.0
    %642 = vmatprep.subr.mxu0 0.0
    %643 = vmatpush1.msra.mxu0 0.0
    %644 = vmatprep.subr.mxu0 0.0
    %645 = vmatpush1.msra.mxu0 0.0
    %646 = vmatprep.subr.mxu0 0.0
    %647 = vmatpush1.msra.mxu0 0.0
    %648 = vmatprep.subr.mxu0 0.0
    %649 = vmatpush1.msra.mxu0 0.0
    %650 = vmatprep.subr.mxu0 0.0
    %651 = vmatpush1.msra.mxu0 0.0
    %652 = vmatprep.subr.mxu0 0.0
    %653 = vmatpush1.msra.mxu0 0.0
    %654 = vmatprep.mubr.f32.mxu0 0.0
    %655 = vmatmul.mubr.f32.gmra.mrb[0].mxu0 %v585
    %v656 = vpop.f32.mrb[0].mxu0
    %v657 = vadd.f32 0.0, %v656
    %v658 = vpop.f32.mrb[0].mxu0
    %v659 = vadd.f32 0.0, %v658
    %660 = vmatprep.mubr.f32.mxu0 0.0
    %661 = vmatmul.mubr.f32.gmra.mrb[0].mxu0 %v588
    %v662 = vpop.f32.mrb[0].mxu0
    %v663 = vadd.f32 0.0, %v662
    %v664 = vpop.f32.mrb[0].mxu0
    %v665 = vadd.f32 0.0, %v664
    %666 = vdwg.mxu0
    %v667 = vadd.f32 %v559, %v657
    %v668 = vadd.f32 %v561, %v659
    %v669 = vadd.f32 %v565, %v663
    %v670 = vadd.f32 %v567, %v665
    %v671 = vld [vmem:[%s8] sm:$0xff]
    %v672 = vld [vmem:[%s8 + $0x8] sm:$0xff]
    %674 = vset.pattern.permute.xlu0 0
    %675 = vperm.xlu0 %674, %v671
    %v676 = vpop.permute.xlu0 %675
    %679 = vset.pattern.permute.xlu0 0
    %680 = vperm.xlu0 %679, %v672
    %v681 = vpop.permute.xlu0 %680
    %v683 = vadd.f32 %v667, %v676
    %v684 = vadd.f32 %v668, %v676
    %v685 = vadd.f32 %v669, %v681
    %v686 = vadd.f32 %v670, %v681
    %v687 = vxor.u32 %v683, 2147483648
    %v688 = vxor.u32 %v684, 2147483648
    %v689 = vxor.u32 %v685, 2147483648
    %v690 = vxor.u32 %v686, 2147483648
    %v691 = vmul.f32 %v687, 1.442695
    %v692 = vpow.pop %v691
    %v693 = vmul.f32 %v688, 1.442695
    %v694 = vpow.pop %v693
    %v695 = vmul.f32 %v689, 1.442695
    %v696 = vpow.pop %v695
    %v697 = vmul.f32 %v690, 1.442695
    %v698 = vpow.pop %v697
    %v699 = vadd.f32 %v692, 1.0
    %v700 = vadd.f32 %v694, 1.0
    %v701 = vadd.f32 %v696, 1.0
    %v702 = vadd.f32 %v698, 1.0
    %v703 = vrcp.pop %v699
    %v704 = vmul.f32 1.0, %v703
    %v705 = vrcp.pop %v700
    %v706 = vmul.f32 1.0, %v705
    %v707 = vrcp.pop %v701
    %v708 = vmul.f32 1.0, %v707
    %v709 = vrcp.pop %v702
    %v710 = vmul.f32 1.0, %v709
    %v711 = vmul.f32 %v683, %v704
    %v712 = vmul.f32 %v684, %v706
    %v713 = vmul.f32 %v685, %v708
    %v714 = vmul.f32 %v686, %v710
    %715 = vrot.lane.b32.xlu0 %v711, 1
    %v716 = vpop.permute.xlu0 %715
    %717 = vrot.lane.b32.xlu0 %v713, 1
    %v718 = vpop.permute.xlu0 %717
    %719 = vrot.lane.b32.xlu0 %v712, 1
    %v720 = vpop.permute.xlu0 %719
    %721 = vrot.lane.b32.xlu0 %v714, 1
    %v722 = vpop.permute.xlu0 %721
    %v723 = vsel %vm98, %v716, %v720
    %v724 = vsel %vm98, %v718, %v722
    %v725 = vsel %vm98, %v720, %v716
    %v726 = vsel %vm98, %v722, %v718
    %v727 = vsel %vm393, %v725, 0.0
    %v728 = vsel %vm394, %v723, 0.0
    %v729 = vsel %vm393, %v726, 0.0
    %v730 = vsel %vm394, %v724, 0.0
    %v731 = vld [vmem:[%s9] sm:$0xff]
    %s732 = scalar_lea.vmem %s9, 8
    %v733 = vld [vmem:[%s732] sm:$0xff]
    %vm734 = vcmask 130048
    %v736 = vsel %vm734, %v733, 0
    %738 = vmatprep.subr.mxu0 %v712
    %739 = vmatpush1.msra.mxu0 %v711
    %740 = vmatprep.subr.mxu0 %v714
    %741 = vmatpush1.msra.mxu0 %v713
    %742 = vmatprep.subr.mxu0 0.0
    %743 = vmatpush1.msra.mxu0 0.0
    %744 = vmatprep.subr.mxu0 0.0
    %745 = vmatpush1.msra.mxu0 0.0
    %746 = vmatprep.subr.mxu0 0.0
    %747 = vmatpush1.msra.mxu0 0.0
    %748 = vmatprep.subr.mxu0 0.0
    %749 = vmatpush1.msra.mxu0 0.0
    %750 = vmatprep.subr.mxu0 0.0
    %751 = vmatpush1.msra.mxu0 0.0
    %752 = vmatprep.subr.mxu0 0.0
    %753 = vmatpush1.msra.mxu0 0.0
    %754 = vmatprep.subr.mxu0 0.0
    %755 = vmatpush1.msra.mxu0 0.0
    %756 = vmatprep.subr.mxu0 0.0
    %757 = vmatpush1.msra.mxu0 0.0
    %758 = vmatprep.subr.mxu0 0.0
    %759 = vmatpush1.msra.mxu0 0.0
    %760 = vmatprep.subr.mxu0 0.0
    %761 = vmatpush1.msra.mxu0 0.0
    %762 = vmatprep.subr.mxu0 0.0
    %763 = vmatpush1.msra.mxu0 0.0
    %764 = vmatprep.subr.mxu0 0.0
    %765 = vmatpush1.msra.mxu0 0.0
    %766 = vmatprep.subr.mxu0 0.0
    %767 = vmatpush1.msra.mxu0 0.0
    %768 = vmatprep.subr.mxu0 0.0
    %769 = vmatpush1.msra.mxu0 0.0
    %770 = vmatprep.subr.mxu0 0.0
    %771 = vmatpush1.msra.mxu0 0.0
    %772 = vmatprep.subr.mxu0 0.0
    %773 = vmatpush1.msra.mxu0 0.0
    %774 = vmatprep.subr.mxu0 0.0
    %775 = vmatpush1.msra.mxu0 0.0
    %776 = vmatprep.subr.mxu0 0.0
    %777 = vmatpush1.msra.mxu0 0.0
    %778 = vmatprep.subr.mxu0 0.0
    %779 = vmatpush1.msra.mxu0 0.0
    %780 = vmatprep.subr.mxu0 0.0
    %781 = vmatpush1.msra.mxu0 0.0
    %782 = vmatprep.subr.mxu0 0.0
    %783 = vmatpush1.msra.mxu0 0.0
    %784 = vmatprep.subr.mxu0 0.0
    %785 = vmatpush1.msra.mxu0 0.0
    %786 = vmatprep.subr.mxu0 0.0
    %787 = vmatpush1.msra.mxu0 0.0
    %788 = vmatprep.subr.mxu0 0.0
    %789 = vmatpush1.msra.mxu0 0.0
    %790 = vmatprep.subr.mxu0 0.0
    %791 = vmatpush1.msra.mxu0 0.0
    %792 = vmatprep.subr.mxu0 0.0
    %793 = vmatpush1.msra.mxu0 0.0
    %794 = vmatprep.subr.mxu0 0.0
    %795 = vmatpush1.msra.mxu0 0.0
    %796 = vmatprep.subr.mxu0 0.0
    %797 = vmatpush1.msra.mxu0 0.0
    %798 = vmatprep.subr.mxu0 0.0
    %799 = vmatpush1.msra.mxu0 0.0
    %800 = vmatprep.subr.mxu0 0.0
    %801 = vmatpush1.msra.mxu0 0.0
    %802 = vmatprep.mubr.f32.mxu0 0.0
    %803 = vmatmul.mubr.f32.gmra.mrb[0].mxu0 %v736
    %v804 = vpop.f32.mrb[0].mxu0
    %v805 = vadd.f32 0.0, %v804
    %v806 = vpop.f32.mrb[0].mxu0
    %v807 = vadd.f32 0.0, %v806
    %808 = vdwg.mxu0
    %v810 = vsel %vm734, %v731, 0
    %812 = vmatprep.subr.mxu0 %v728
    %813 = vmatpush1.msra.mxu0 %v727
    %814 = vmatprep.subr.mxu0 %v730
    %815 = vmatpush1.msra.mxu0 %v729
    %816 = vmatprep.subr.mxu0 0.0
    %817 = vmatpush1.msra.mxu0 0.0
    %818 = vmatprep.subr.mxu0 0.0
    %819 = vmatpush1.msra.mxu0 0.0
    %820 = vmatprep.subr.mxu0 0.0
    %821 = vmatpush1.msra.mxu0 0.0
    %822 = vmatprep.subr.mxu0 0.0
    %823 = vmatpush1.msra.mxu0 0.0
    %824 = vmatprep.subr.mxu0 0.0
    %825 = vmatpush1.msra.mxu0 0.0
    %826 = vmatprep.subr.mxu0 0.0
    %827 = vmatpush1.msra.mxu0 0.0
    %828 = vmatprep.subr.mxu0 0.0
    %829 = vmatpush1.msra.mxu0 0.0
    %830 = vmatprep.subr.mxu0 0.0
    %831 = vmatpush1.msra.mxu0 0.0
    %832 = vmatprep.subr.mxu0 0.0
    %833 = vmatpush1.msra.mxu0 0.0
    %834 = vmatprep.subr.mxu0 0.0
    %835 = vmatpush1.msra.mxu0 0.0
    %836 = vmatprep.subr.mxu0 0.0
    %837 = vmatpush1.msra.mxu0 0.0
    %838 = vmatprep.subr.mxu0 0.0
    %839 = vmatpush1.msra.mxu0 0.0
    %840 = vmatprep.subr.mxu0 0.0
    %841 = vmatpush1.msra.mxu0 0.0
    %842 = vmatprep.subr.mxu0 0.0
    %843 = vmatpush1.msra.mxu0 0.0
    %844 = vmatprep.subr.mxu0 0.0
    %845 = vmatpush1.msra.mxu0 0.0
    %846 = vmatprep.subr.mxu0 0.0
    %847 = vmatpush1.msra.mxu0 0.0
    %848 = vmatprep.subr.mxu0 0.0
    %849 = vmatpush1.msra.mxu0 0.0
    %850 = vmatprep.subr.mxu0 0.0
    %851 = vmatpush1.msra.mxu0 0.0
    %852 = vmatprep.subr.mxu0 0.0
    %853 = vmatpush1.msra.mxu0 0.0
    %854 = vmatprep.subr.mxu0 0.0
    %855 = vmatpush1.msra.mxu0 0.0
    %856 = vmatprep.subr.mxu0 0.0
    %857 = vmatpush1.msra.mxu0 0.0
    %858 = vmatprep.subr.mxu0 0.0
    %859 = vmatpush1.msra.mxu0 0.0
    %860 = vmatprep.subr.mxu0 0.0
    %861 = vmatpush1.msra.mxu0 0.0
    %862 = vmatprep.subr.mxu0 0.0
    %863 = vmatpush1.msra.mxu0 0.0
    %864 = vmatprep.subr.mxu0 0.0
    %865 = vmatpush1.msra.mxu0 0.0
    %866 = vmatprep.subr.mxu0 0.0
    %867 = vmatpush1.msra.mxu0 0.0
    %868 = vmatprep.subr.mxu0 0.0
    %869 = vmatpush1.msra.mxu0 0.0
    %870 = vmatprep.subr.mxu0 0.0
    %871 = vmatpush1.msra.mxu0 0.0
    %872 = vmatprep.subr.mxu0 0.0
    %873 = vmatpush1.msra.mxu0 0.0
    %874 = vmatprep.subr.mxu0 0.0
    %875 = vmatpush1.msra.mxu0 0.0
    %876 = vmatprep.mubr.f32.mxu0 0.0
    %877 = vmatmul.mubr.f32.gmra.mrb[0].mxu0 %v810
    %v878 = vpop.f32.mrb[0].mxu0
    %v879 = vadd.f32 %v805, %v878
    %v880 = vpop.f32.mrb[0].mxu0
    %v881 = vadd.f32 %v807, %v880
    %882 = vdwg.mxu0
    %883 = vrot.lane.b32.xlu0 %v711, 127
    %v884 = vpop.permute.xlu0 %883
    %885 = vrot.lane.b32.xlu0 %v713, 127
    %v886 = vpop.permute.xlu0 %885
    %887 = vrot.lane.b32.xlu0 %v712, 127
    %v888 = vpop.permute.xlu0 %887
    %889 = vrot.lane.b32.xlu0 %v714, 127
    %v890 = vpop.permute.xlu0 %889
    %v891 = vsel %vm272, %v884, %v888
    %v892 = vsel %vm272, %v886, %v890
    %v893 = vsel %vm272, %v888, %v884
    %v894 = vsel %vm272, %v890, %v886
    %v895 = vsel %vm577, %v891, 0.0
    %v896 = vsel %vm578, %v893, 0.0
    %v897 = vsel %vm577, %v892, 0.0
    %v898 = vsel %vm578, %v894, 0.0
    %s899 = scalar_lea.vmem %s9, 16
    %v900 = vld [vmem:[%s899] sm:$0xff]
    %v902 = vsel %vm734, %v900, 0
    %904 = vmatprep.subr.mxu0 %v896
    %905 = vmatpush1.msra.mxu0 %v895
    %906 = vmatprep.subr.mxu0 %v898
    %907 = vmatpush1.msra.mxu0 %v897
    %908 = vmatprep.subr.mxu0 0.0
    %909 = vmatpush1.msra.mxu0 0.0
    %910 = vmatprep.subr.mxu0 0.0
    %911 = vmatpush1.msra.mxu0 0.0
    %912 = vmatprep.subr.mxu0 0.0
    %913 = vmatpush1.msra.mxu0 0.0
    %914 = vmatprep.subr.mxu0 0.0
    %915 = vmatpush1.msra.mxu0 0.0
    %916 = vmatprep.subr.mxu0 0.0
    %917 = vmatpush1.msra.mxu0 0.0
    %918 = vmatprep.subr.mxu0 0.0
    %919 = vmatpush1.msra.mxu0 0.0
    %920 = vmatprep.subr.mxu0 0.0
    %921 = vmatpush1.msra.mxu0 0.0
    %922 = vmatprep.subr.mxu0 0.0
    %923 = vmatpush1.msra.mxu0 0.0
    %924 = vmatprep.subr.mxu0 0.0
    %925 = vmatpush1.msra.mxu0 0.0
    %926 = vmatprep.subr.mxu0 0.0
    %927 = vmatpush1.msra.mxu0 0.0
    %928 = vmatprep.subr.mxu0 0.0
    %929 = vmatpush1.msra.mxu0 0.0
    %930 = vmatprep.subr.mxu0 0.0
    %931 = vmatpush1.msra.mxu0 0.0
    %932 = vmatprep.subr.mxu0 0.0
    %933 = vmatpush1.msra.mxu0 0.0
    %934 = vmatprep.subr.mxu0 0.0
    %935 = vmatpush1.msra.mxu0 0.0
    %936 = vmatprep.subr.mxu0 0.0
    %937 = vmatpush1.msra.mxu0 0.0
    %938 = vmatprep.subr.mxu0 0.0
    %939 = vmatpush1.msra.mxu0 0.0
    %940 = vmatprep.subr.mxu0 0.0
    %941 = vmatpush1.msra.mxu0 0.0
    %942 = vmatprep.subr.mxu0 0.0
    %943 = vmatpush1.msra.mxu0 0.0
    %944 = vmatprep.subr.mxu0 0.0
    %945 = vmatpush1.msra.mxu0 0.0
    %946 = vmatprep.subr.mxu0 0.0
    %947 = vmatpush1.msra.mxu0 0.0
    %948 = vmatprep.subr.mxu0 0.0
    %949 = vmatpush1.msra.mxu0 0.0
    %950 = vmatprep.subr.mxu0 0.0
    %951 = vmatpush1.msra.mxu0 0.0
    %952 = vmatprep.subr.mxu0 0.0
    %953 = vmatpush1.msra.mxu0 0.0
    %954 = vmatprep.subr.mxu0 0.0
    %955 = vmatpush1.msra.mxu0 0.0
    %956 = vmatprep.subr.mxu0 0.0
    %957 = vmatpush1.msra.mxu0 0.0
    %958 = vmatprep.subr.mxu0 0.0
    %959 = vmatpush1.msra.mxu0 0.0
    %960 = vmatprep.subr.mxu0 0.0
    %961 = vmatpush1.msra.mxu0 0.0
    %962 = vmatprep.subr.mxu0 0.0
    %963 = vmatpush1.msra.mxu0 0.0
    %964 = vmatprep.subr.mxu0 0.0
    %965 = vmatpush1.msra.mxu0 0.0
    %966 = vmatprep.subr.mxu0 0.0
    %967 = vmatpush1.msra.mxu0 0.0
    %968 = vmatprep.mubr.f32.mxu0 0.0
    %969 = vmatmul.mubr.f32.gmra.mrb[0].mxu0 %v902
    %v970 = vpop.f32.mrb[0].mxu0
    %v971 = vadd.f32 0.0, %v970
    %v972 = vpop.f32.mrb[0].mxu0
    %v973 = vadd.f32 0.0, %v972
    %974 = vdwg.mxu0
    %v975 = vadd.f32 %v879, %v971
    %v976 = vadd.f32 %v881, %v973
    %v977 = vld [vmem:[%s10] sm:$0xff]
    %979 = vset.pattern.permute.xlu0 0
    %980 = vperm.xlu0 %979, %v977
    %v981 = vpop.permute.xlu0 %980
    %v983 = vadd.f32 %v975, %v981
    %v984 = vadd.f32 %v976, %v981
    %v985 = vxor.u32 %v983, 2147483648
    %v986 = vxor.u32 %v984, 2147483648
    %v987 = vmul.f32 %v985, 1.442695
    %v988 = vpow.pop %v987
    %v989 = vmul.f32 %v986, 1.442695
    %v990 = vpow.pop %v989
    %v991 = vadd.f32 %v988, 1.0
    %v992 = vadd.f32 %v990, 1.0
    %v993 = vrcp.pop %v991
    %v994 = vmul.f32 1.0, %v993
    %v995 = vrcp.pop %v992
    %v996 = vmul.f32 1.0, %v995
    %v997 = vmul.f32 %v983, %v994
    %v998 = vmul.f32 %v984, %v996
    %999 = vrot.lane.b32.xlu0 %v997, 1
    %v1000 = vpop.permute.xlu0 %999
    %1001 = vrot.lane.b32.xlu0 %v998, 1
    %v1002 = vpop.permute.xlu0 %1001
    %v1003 = vsel %vm98, %v1000, %v1002
    %v1004 = vsel %vm98, %v1002, %v1000
    %v1005 = vsel %vm393, %v1004, 0.0
    %v1006 = vsel %vm394, %v1003, 0.0
    %v1007 = vld [vmem:[%s11] sm:$0x1]
    %s1008 = scalar_lea.vmem %s11, 1
    %v1009 = vld [vmem:[%s1008] sm:$0x1]
    %v1011 = vsel %vm402, %v1009, 0
    %1013 = vmatprep.subr.mxu0 %v998
    %1014 = vmatpush1.msra.mxu0 %v997
    %1015 = vmatprep.subr.mxu0 0.0
    %1016 = vmatpush1.msra.mxu0 0.0
    %1017 = vmatprep.subr.mxu0 0.0
    %1018 = vmatpush1.msra.mxu0 0.0
    %1019 = vmatprep.subr.mxu0 0.0
    %1020 = vmatpush1.msra.mxu0 0.0
    %1021 = vmatprep.subr.mxu0 0.0
    %1022 = vmatpush1.msra.mxu0 0.0
    %1023 = vmatprep.subr.mxu0 0.0
    %1024 = vmatpush1.msra.mxu0 0.0
    %1025 = vmatprep.subr.mxu0 0.0
    %1026 = vmatpush1.msra.mxu0 0.0
    %1027 = vmatprep.subr.mxu0 0.0
    %1028 = vmatpush1.msra.mxu0 0.0
    %1029 = vmatprep.subr.mxu0 0.0
    %1030 = vmatpush1.msra.mxu0 0.0
    %1031 = vmatprep.subr.mxu0 0.0
    %1032 = vmatpush1.msra.mxu0 0.0
    %1033 = vmatprep.subr.mxu0 0.0
    %1034 = vmatpush1.msra.mxu0 0.0
    %1035 = vmatprep.subr.mxu0 0.0
    %1036 = vmatpush1.msra.mxu0 0.0
    %1037 = vmatprep.subr.mxu0 0.0
    %1038 = vmatpush1.msra.mxu0 0.0
    %1039 = vmatprep.subr.mxu0 0.0
    %1040 = vmatpush1.msra.mxu0 0.0
    %1041 = vmatprep.subr.mxu0 0.0
    %1042 = vmatpush1.msra.mxu0 0.0
    %1043 = vmatprep.subr.mxu0 0.0
    %1044 = vmatpush1.msra.mxu0 0.0
    %1045 = vmatprep.subr.mxu0 0.0
    %1046 = vmatpush1.msra.mxu0 0.0
    %1047 = vmatprep.subr.mxu0 0.0
    %1048 = vmatpush1.msra.mxu0 0.0
    %1049 = vmatprep.subr.mxu0 0.0
    %1050 = vmatpush1.msra.mxu0 0.0
    %1051 = vmatprep.subr.mxu0 0.0
    %1052 = vmatpush1.msra.mxu0 0.0
    %1053 = vmatprep.subr.mxu0 0.0
    %1054 = vmatpush1.msra.mxu0 0.0
    %1055 = vmatprep.subr.mxu0 0.0
    %1056 = vmatpush1.msra.mxu0 0.0
    %1057 = vmatprep.subr.mxu0 0.0
    %1058 = vmatpush1.msra.mxu0 0.0
    %1059 = vmatprep.subr.mxu0 0.0
    %1060 = vmatpush1.msra.mxu0 0.0
    %1061 = vmatprep.subr.mxu0 0.0
    %1062 = vmatpush1.msra.mxu0 0.0
    %1063 = vmatprep.subr.mxu0 0.0
    %1064 = vmatpush1.msra.mxu0 0.0
    %1065 = vmatprep.subr.mxu0 0.0
    %1066 = vmatpush1.msra.mxu0 0.0
    %1067 = vmatprep.subr.mxu0 0.0
    %1068 = vmatpush1.msra.mxu0 0.0
    %1069 = vmatprep.subr.mxu0 0.0
    %1070 = vmatpush1.msra.mxu0 0.0
    %1071 = vmatprep.subr.mxu0 0.0
    %1072 = vmatpush1.msra.mxu0 0.0
    %1073 = vmatprep.subr.mxu0 0.0
    %1074 = vmatpush1.msra.mxu0 0.0
    %1075 = vmatprep.subr.mxu0 0.0
    %1076 = vmatpush1.msra.mxu0 0.0
    %1077 = vmatprep.mubr.f32.mxu0 0.0
    %1078 = vmatmul.mubr.f32.gmra.mrb[0].mxu0 %v1011
    %v1079 = vpop.f32.mrb[0].mxu0
    %v1080 = vadd.f32 0.0, %v1079
    %v1081 = vpop.f32.mrb[0].mxu0
    %v1082 = vadd.f32 0.0, %v1081
    %1083 = vdwg.mxu0
    %v1085 = vsel %vm402, %v1007, 0
    %1087 = vmatprep.subr.mxu0 %v1006
    %1088 = vmatpush1.msra.mxu0 %v1005
    %1089 = vmatprep.subr.mxu0 0.0
    %1090 = vmatpush1.msra.mxu0 0.0
    %1091 = vmatprep.subr.mxu0 0.0
    %1092 = vmatpush1.msra.mxu0 0.0
    %1093 = vmatprep.subr.mxu0 0.0
    %1094 = vmatpush1.msra.mxu0 0.0
    %1095 = vmatprep.subr.mxu0 0.0
    %1096 = vmatpush1.msra.mxu0 0.0
    %1097 = vmatprep.subr.mxu0 0.0
    %1098 = vmatpush1.msra.mxu0 0.0
    %1099 = vmatprep.subr.mxu0 0.0
    %1100 = vmatpush1.msra.mxu0 0.0
    %1101 = vmatprep.subr.mxu0 0.0
    %1102 = vmatpush1.msra.mxu0 0.0
    %1103 = vmatprep.subr.mxu0 0.0
    %1104 = vmatpush1.msra.mxu0 0.0
    %1105 = vmatprep.subr.mxu0 0.0
    %1106 = vmatpush1.msra.mxu0 0.0
    %1107 = vmatprep.subr.mxu0 0.0
    %1108 = vmatpush1.msra.mxu0 0.0
    %1109 = vmatprep.subr.mxu0 0.0
    %1110 = vmatpush1.msra.mxu0 0.0
    %1111 = vmatprep.subr.mxu0 0.0
    %1112 = vmatpush1.msra.mxu0 0.0
    %1113 = vmatprep.subr.mxu0 0.0
    %1114 = vmatpush1.msra.mxu0 0.0
    %1115 = vmatprep.subr.mxu0 0.0
    %1116 = vmatpush1.msra.mxu0 0.0
    %1117 = vmatprep.subr.mxu0 0.0
    %1118 = vmatpush1.msra.mxu0 0.0
    %1119 = vmatprep.subr.mxu0 0.0
    %1120 = vmatpush1.msra.mxu0 0.0
    %1121 = vmatprep.subr.mxu0 0.0
    %1122 = vmatpush1.msra.mxu0 0.0
    %1123 = vmatprep.subr.mxu0 0.0
    %1124 = vmatpush1.msra.mxu0 0.0
    %1125 = vmatprep.subr.mxu0 0.0
    %1126 = vmatpush1.msra.mxu0 0.0
    %1127 = vmatprep.subr.mxu0 0.0
    %1128 = vmatpush1.msra.mxu0 0.0
    %1129 = vmatprep.subr.mxu0 0.0
    %1130 = vmatpush1.msra.mxu0 0.0
    %1131 = vmatprep.subr.mxu0 0.0
    %1132 = vmatpush1.msra.mxu0 0.0
    %1133 = vmatprep.subr.mxu0 0.0
    %1134 = vmatpush1.msra.mxu0 0.0
    %1135 = vmatprep.subr.mxu0 0.0
    %1136 = vmatpush1.msra.mxu0 0.0
    %1137 = vmatprep.subr.mxu0 0.0
    %1138 = vmatpush1.msra.mxu0 0.0
    %1139 = vmatprep.subr.mxu0 0.0
    %1140 = vmatpush1.msra.mxu0 0.0
    %1141 = vmatprep.subr.mxu0 0.0
    %1142 = vmatpush1.msra.mxu0 0.0
    %1143 = vmatprep.subr.mxu0 0.0
    %1144 = vmatpush1.msra.mxu0 0.0
    %1145 = vmatprep.subr.mxu0 0.0
    %1146 = vmatpush1.msra.mxu0 0.0
    %1147 = vmatprep.subr.mxu0 0.0
    %1148 = vmatpush1.msra.mxu0 0.0
    %1149 = vmatprep.subr.mxu0 0.0
    %1150 = vmatpush1.msra.mxu0 0.0
    %1151 = vmatprep.mubr.f32.mxu0 0.0
    %1152 = vmatmul.mubr.f32.gmra.mrb[0].mxu0 %v1085
    %v1153 = vpop.f32.mrb[0].mxu0
    %v1154 = vadd.f32 %v1080, %v1153
    %v1155 = vpop.f32.mrb[0].mxu0
    %v1156 = vadd.f32 %v1082, %v1155
    %1157 = vdwg.mxu0
    %1158 = vrot.lane.b32.xlu0 %v997, 127
    %v1159 = vpop.permute.xlu0 %1158
    %1160 = vrot.lane.b32.xlu0 %v998, 127
    %v1161 = vpop.permute.xlu0 %1160
    %v1162 = vsel %vm272, %v1159, %v1161
    %v1163 = vsel %vm272, %v1161, %v1159
    %v1164 = vsel %vm577, %v1162, 0.0
    %v1165 = vsel %vm578, %v1163, 0.0
    %s1166 = scalar_lea.vmem %s11, 2
    %v1167 = vld [vmem:[%s1166] sm:$0x1]
    %v1169 = vsel %vm402, %v1167, 0
    %1171 = vmatprep.subr.mxu0 %v1165
    %1172 = vmatpush1.msra.mxu0 %v1164
    %1173 = vmatprep.subr.mxu0 0.0
    %1174 = vmatpush1.msra.mxu0 0.0
    %1175 = vmatprep.subr.mxu0 0.0
    %1176 = vmatpush1.msra.mxu0 0.0
    %1177 = vmatprep.subr.mxu0 0.0
    %1178 = vmatpush1.msra.mxu0 0.0
    %1179 = vmatprep.subr.mxu0 0.0
    %1180 = vmatpush1.msra.mxu0 0.0
    %1181 = vmatprep.subr.mxu0 0.0
    %1182 = vmatpush1.msra.mxu0 0.0
    %1183 = vmatprep.subr.mxu0 0.0
    %1184 = vmatpush1.msra.mxu0 0.0
    %1185 = vmatprep.subr.mxu0 0.0
    %1186 = vmatpush1.msra.mxu0 0.0
    %1187 = vmatprep.subr.mxu0 0.0
    %1188 = vmatpush1.msra.mxu0 0.0
    %1189 = vmatprep.subr.mxu0 0.0
    %1190 = vmatpush1.msra.mxu0 0.0
    %1191 = vmatprep.subr.mxu0 0.0
    %1192 = vmatpush1.msra.mxu0 0.0
    %1193 = vmatprep.subr.mxu0 0.0
    %1194 = vmatpush1.msra.mxu0 0.0
    %1195 = vmatprep.subr.mxu0 0.0
    %1196 = vmatpush1.msra.mxu0 0.0
    %1197 = vmatprep.subr.mxu0 0.0
    %1198 = vmatpush1.msra.mxu0 0.0
    %1199 = vmatprep.subr.mxu0 0.0
    %1200 = vmatpush1.msra.mxu0 0.0
    %1201 = vmatprep.subr.mxu0 0.0
    %1202 = vmatpush1.msra.mxu0 0.0
    %1203 = vmatprep.subr.mxu0 0.0
    %1204 = vmatpush1.msra.mxu0 0.0
    %1205 = vmatprep.subr.mxu0 0.0
    %1206 = vmatpush1.msra.mxu0 0.0
    %1207 = vmatprep.subr.mxu0 0.0
    %1208 = vmatpush1.msra.mxu0 0.0
    %1209 = vmatprep.subr.mxu0 0.0
    %1210 = vmatpush1.msra.mxu0 0.0
    %1211 = vmatprep.subr.mxu0 0.0
    %1212 = vmatpush1.msra.mxu0 0.0
    %1213 = vmatprep.subr.mxu0 0.0
    %1214 = vmatpush1.msra.mxu0 0.0
    %1215 = vmatprep.subr.mxu0 0.0
    %1216 = vmatpush1.msra.mxu0 0.0
    %1217 = vmatprep.subr.mxu0 0.0
    %1218 = vmatpush1.msra.mxu0 0.0
    %1219 = vmatprep.subr.mxu0 0.0
    %1220 = vmatpush1.msra.mxu0 0.0
    %1221 = vmatprep.subr.mxu0 0.0
    %1222 = vmatpush1.msra.mxu0 0.0
    %1223 = vmatprep.subr.mxu0 0.0
    %1224 = vmatpush1.msra.mxu0 0.0
    %1225 = vmatprep.subr.mxu0 0.0
    %1226 = vmatpush1.msra.mxu0 0.0
    %1227 = vmatprep.subr.mxu0 0.0
    %1228 = vmatpush1.msra.mxu0 0.0
    %1229 = vmatprep.subr.mxu0 0.0
    %1230 = vmatpush1.msra.mxu0 0.0
    %1231 = vmatprep.subr.mxu0 0.0
    %1232 = vmatpush1.msra.mxu0 0.0
    %1233 = vmatprep.subr.mxu0 0.0
    %1234 = vmatpush1.msra.mxu0 0.0
    %1235 = vmatprep.mubr.f32.mxu0 0.0
    %1236 = vmatmul.mubr.f32.gmra.mrb[0].mxu0 %v1169
    %v1237 = vpop.f32.mrb[0].mxu0
    %v1238 = vadd.f32 0.0, %v1237
    %v1239 = vpop.f32.mrb[0].mxu0
    %v1240 = vadd.f32 0.0, %v1239
    %1241 = vdwg.mxu0
    %v1242 = vadd.f32 %v1154, %v1238
    %v1243 = vadd.f32 %v1156, %v1240
    %v1244 = vld [vmem:[#allocation2] sm:$0x1]
    %1246 = vset.pattern.permute.xlu0 0
    %1247 = vperm.xlu0 %1246, %v1244
    %v1248 = vpop.permute.xlu0 %1247
    %v1250 = vlaneseq
    %v1251 = vshrl.u32 %v1250, 7
    %v1252 = vsub.s32 0, %v1251
    %v1253 = vrot.slane %v1248, %v1252
    %v1254 = vadd.f32 %v1242, %v1253
    %v1255 = vadd.f32 %v1243, %v1253
    %v1257 = vlaneseq
    %v1258 = vshrl.u32 %v1257, 7
    %v1259 = vsub.s32 0, %v1258
    %v1260 = vrot.slane %v47, %v1259
    %v1261 = vlaneseq
    %v1262 = vshrl.u32 %v1261, 7
    %v1263 = vsub.s32 1, %v1262
    %v1264 = vrot.slane %v47, %v1263
    %v1267 = vsub.f32 %v1254, %v1260
    %v1268 = vsub.f32 %v1255, %v1264
    %v1269 = vmul.f32 %v1267, %v1267
    %v1270 = vmul.f32 %v1268, %v1268
    %v1271 = vsel %vm112, %v1269, 0.0
    %v1272 = vsel %vm112, %v1270, 0.0
    %v1273 = vadd.f32 %v1271, %v1272
    %1274 = vadd.xlane.f32.xlu0 %v1273
    %v1275 = vpop.xlane.xlu0 %1274
    %v1276 = vrot.slane %v1275, 4
    %v1277 = vadd.f32 %v1275, %v1276
    %v1278 = vrot.slane %v1277, 2
    %v1279 = vadd.f32 %v1277, %v1278
    %v1280 = vrot.slane %v1279, 1
    %v1281 = vadd.f32 %v1279, %v1280
    %s1282 = vtos %v1281
    %s1283 = smul.f32 %s1282, 0.00390625
    %s1284 = scalar_lea.smem [#allocation3], 0
    %1285 = sst [smem:[%s1284]] %s1283
    // Predicated region
    $region54: #{_pdiff_forward.1} parent=1 // pred_check
      _
    $region55: #{_pdiff_forward.1} parent=1 // pred_check_branch
      %1287 = sbr.rel (0) target = $region57
    $region56: #{_pdiff_forward.1} parent=1 // pred_region
      %s1289 = ssub.s32 16, 16
      %1290 = vsyncadd [#allocation4], %s1289
      %1293 = dma.smem_to_hbm [#allocation3], 16, %s13, [#allocation4]
    $region57: #{_pdiff_forward.1} parent=1 // pred_fallthru
      _
    // Predicated region
    $region58: #{_pdiff_forward.1} parent=1 // pred_check
      _
    $region59: #{_pdiff_forward.1} parent=1 // pred_check_branch
      %1295 = sbr.rel (0) target = $region61
    $region60: #{_pdiff_forward.1} parent=1 // pred_region
      %1296 = dma.done [#allocation4], 16
    $region61: #{_pdiff_forward.1} parent=1 // pred_fallthru
      _
    %1297 = sfence
    %1298 = vsyncpa [#allocation4], 1

</llo_original>
